<compile_context>
chip_gen: v6e
topology: v6e:2x2x1
jax: 0.10.0
libtpu: 0.0.40
codegen_flags: <defaults>
</compile_context>

<pallas_src>
import functools
import math

import jax
import jax.numpy as jnp
from jax import lax
from jax.experimental import pallas as pl
from jax.experimental.pallas import tpu as pltpu

EMBED = 32
NUM_HEADS = 4
D_K = EMBED // NUM_HEADS


def mha_kernel(x_ref, wqkv_ref, bqkv_ref, wo_ref, bo_ref, o_ref, heads_ref,
               *, batch, seq):
    # x_ref:     (B*S, 3E)  lane-concat of [Q | K | V] source activations
    # wqkv_ref:  (3E, 3E)   block-diag [Wq^T * scale, Wk^T, Wv^T]
    # bqkv_ref:  (1, 3E)    [bq*scale | bk | bv]
    # wo_ref:    (E, E)     Wo^T ; bo_ref: (1, E)
    # o_ref:     (B*S, E)
    # heads_ref: (B*S, E)   f32 VMEM scratch holding concatenated head outputs

    # All three linear projections in a single MXU push.
    qkv = jnp.dot(x_ref[...], wqkv_ref[...],
                  preferred_element_type=jnp.float32) + bqkv_ref[...]

    # TODO(synk): mask is None at every call site in this model; the
    # masked_fill path is not implemented.
    for b in range(batch):
        rows = slice(b * seq, (b + 1) * seq)
        for h in range(NUM_HEADS):
            q_sl = slice(h * D_K, (h + 1) * D_K)
            k_sl = slice(EMBED + h * D_K, EMBED + (h + 1) * D_K)
            v_sl = slice(2 * EMBED + h * D_K, 2 * EMBED + (h + 1) * D_K)
            qh = qkv[rows, q_sl]          # (S, d_k), scale already folded in
            kh = qkv[rows, k_sl]          # (S, d_k)
            vh = qkv[rows, v_sl]          # (S, d_k)

            # q @ k^T without materializing a transpose.
            scores = lax.dot_general(qh, kh, (((1,), (1,)), ((), ())),
                                     preferred_element_type=jnp.float32)
            scores = scores - jnp.max(scores, axis=-1, keepdims=True)
            e = jnp.exp(scores)
            inv = pl.reciprocal(jnp.sum(e, axis=-1, keepdims=True), approx=True)
            attn = e * inv                                       # (S, S)

            # Write this head's output into its fixed column slice.
            heads_ref[rows, q_sl] = jnp.dot(attn, vh,
                                            preferred_element_type=jnp.float32)

    out = jnp.dot(heads_ref[...], wo_ref[...],
                  preferred_element_type=jnp.float32) + bo_ref[...]
    o_ref[...] = out.astype(o_ref.dtype)


def multi_head_attention(Q, K, V, params):
    """Pallas forward of MultiHeadAttention. Q, K, V: (B, S, E) float32."""
    B, S, E = Q.shape
    assert E == EMBED
    scale = 1.0 / math.sqrt(D_K)

    # Fuse the three projection weights into one block-diagonal (3E, 3E)
    # matrix; fold 1/sqrt(d_k) into the Q block and its bias.
    w_fused = jnp.zeros((3 * E, 3 * E), jnp.float32)
    w_fused = w_fused.at[0:E, 0:E].set(params["wq"].T * scale)
    w_fused = w_fused.at[E:2 * E, E:2 * E].set(params["wk"].T)
    w_fused = w_fused.at[2 * E:3 * E, 2 * E:3 * E].set(params["wv"].T)
    b_fused = jnp.concatenate(
        [params["bq"] * scale, params["bk"], params["bv"]]).reshape(1, 3 * E)
    wo_t = params["wo"].T
    bo = params["bo"].reshape(1, E)

    # Flatten batch into the sublane dim and lane-concat Q/K/V sources:
    # one (B*S, 3E) activation slab, no per-batch grid.
    x_cat = jnp.concatenate(
        [Q.reshape(B * S, E), K.reshape(B * S, E), V.reshape(B * S, E)],
        axis=-1)

    out_flat = pl.pallas_call(
        functools.partial(mha_kernel, batch=B, seq=S),
        out_shape=jax.ShapeDtypeStruct((B * S, E), Q.dtype),
        scratch_shapes=[pltpu.VMEM((B * S, E), jnp.float32)],
    )(x_cat, w_fused, b_fused, wo_t, bo)
    return out_flat.reshape(B, S, E)


def mha_reference(Q, K, V, params):
    """Pure-JAX reference mirroring the PyTorch module."""
    B, S, E = Q.shape

    def lin(x, w, b):
        return x @ w.T + b

    qp = lin(Q, params["wq"], params["bq"]).reshape(B, S, NUM_HEADS, D_K).transpose(0, 2, 1, 3)
    kp = lin(K, params["wk"], params["bk"]).reshape(B, S, NUM_HEADS, D_K).transpose(0, 2, 1, 3)
    vp = lin(V, params["wv"], params["bv"]).reshape(B, S, NUM_HEADS, D_K).transpose(0, 2, 1, 3)
    scores = jnp.einsum("bhqd,bhkd->bhqk", qp, kp) / math.sqrt(D_K)
    attn = jax.nn.softmax(scores, axis=-1)
    out = jnp.einsum("bhqk,bhkd->bhqd", attn, vp)
    out = out.transpose(0, 2, 1, 3).reshape(B, S, E)
    return lin(out, params["wo"], params["bo"])


def init_params(key):
    """Deterministic nn.Linear-style init: U(-1/sqrt(in), 1/sqrt(in))."""
    ks = jax.random.split(key, 8)
    bound = 1.0 / math.sqrt(EMBED)

    def u(k, shape):
        return jax.random.uniform(k, shape, jnp.float32, -bound, bound)

    return {
        "wq": u(ks[0], (EMBED, EMBED)), "bq": u(ks[1], (EMBED,)),
        "wk": u(ks[2], (EMBED, EMBED)), "bk": u(ks[3], (EMBED,)),
        "wv": u(ks[4], (EMBED, EMBED)), "bv": u(ks[5], (EMBED,)),
        "wo": u(ks[6], (EMBED, EMBED)), "bo": u(ks[7], (EMBED,)),
    }


if __name__ == "__main__":
    key = jax.random.PRNGKey(0)
    k_params, k_x, k_q, k_kv = jax.random.split(key, 4)

    B, S = 2, 10  # matches src = torch.randint(0, vocab_size, (2, 10))
    params = init_params(k_params)

    # Self-attention usage (encoder / decoder self-attn): Q = K = V = x.
    x = jax.random.normal(k_x, (B, S, EMBED), jnp.float32)
    out = jax.block_until_ready(multi_head_attention(x, x, x, params))
    ref = mha_reference(x, x, x, params)
    assert out.shape == (B, S, EMBED)
    # 1e-3 tolerance because the softmax normalizer uses the EUP approximate
    # reciprocal (pl.reciprocal(..., approx=True)).
    assert jnp.allclose(out, ref, atol=1e-3, rtol=1e-3), "self-attn mismatch"

    # Cross-attention usage (decoder enc-dec attention): Q != K = V.
    q_in = jax.random.normal(k_q, (B, S, EMBED), jnp.float32)
    kv_in = jax.random.normal(k_kv, (B, S, EMBED), jnp.float32)
    out_x = jax.block_until_ready(multi_head_attention(q_in, kv_in, kv_in, params))
    ref_x = mha_reference(q_in, kv_in, kv_in, params)
    assert jnp.allclose(out_x, ref_x, atol=1e-3, rtol=1e-3), "cross-attn mismatch"

    print("KERNEL_OK")
</pallas_src>

<mosaic_0001>
module attributes {stable_mosaic.version = 11 : i64} {
  func.func @mha_kernel(%arg0: memref<20x96xf32, #tpu.memory_space<vmem>>, %arg1: memref<96x96xf32, #tpu.memory_space<vmem>>, %arg2: memref<1x96xf32, #tpu.memory_space<vmem>>, %arg3: memref<32x32xf32, #tpu.memory_space<vmem>>, %arg4: memref<1x32xf32, #tpu.memory_space<vmem>>, %arg5: memref<20x32xf32, #tpu.memory_space<vmem>>, %arg6: memref<20x32xf32, #tpu.memory_space<vmem>>) attributes {dimension_semantics = [], scalar_prefetch = 0 : i64, scratch_operands = 1 : i64, tpu.core_type = #tpu.core_type<tc>} {
    %c0 = arith.constant 0 : index
    %c0_0 = arith.constant 0 : index
    %0 = vector.load %arg0[%c0, %c0_0] : memref<20x96xf32, #tpu.memory_space<vmem>>, vector<20x96xf32>
    %c0_1 = arith.constant 0 : index
    %c0_2 = arith.constant 0 : index
    %1 = vector.load %arg1[%c0_1, %c0_2] : memref<96x96xf32, #tpu.memory_space<vmem>>, vector<96x96xf32>
    %cst = arith.constant dense<0.000000e+00> : vector<20x96xf32>
    %2 = tpu.matmul %0, %1, %cst {dimension_numbers = #tpu.dot_dimension_numbers<[1], [0], [0], [1], [0, 0, 1, 1], [], []>} : vector<20x96xf32>, vector<96x96xf32>, vector<20x96xf32> -> vector<20x96xf32>
    %c0_3 = arith.constant 0 : index
    %c0_4 = arith.constant 0 : index
    %3 = vector.load %arg2[%c0_3, %c0_4] : memref<1x96xf32, #tpu.memory_space<vmem>>, vector<1x96xf32>
    %4 = vector.broadcast %3 : vector<1x96xf32> to vector<20x96xf32>
    %5 = arith.addf %2, %4 : vector<20x96xf32>
    %6 = vector.extract_strided_slice %5 {offsets = [0, 0], sizes = [10, 8], strides = [1, 1]} : vector<20x96xf32> to vector<10x8xf32>
    %7 = vector.extract_strided_slice %5 {offsets = [0, 32], sizes = [10, 8], strides = [1, 1]} : vector<20x96xf32> to vector<10x8xf32>
    %8 = vector.extract_strided_slice %5 {offsets = [0, 64], sizes = [10, 8], strides = [1, 1]} : vector<20x96xf32> to vector<10x8xf32>
    %cst_5 = arith.constant dense<0.000000e+00> : vector<10x10xf32>
    %9 = tpu.matmul %6, %7, %cst_5 {dimension_numbers = #tpu.dot_dimension_numbers<[1], [1], [0], [0], [0, 0, 1, 0], [], []>} : vector<10x8xf32>, vector<10x8xf32>, vector<10x10xf32> -> vector<10x10xf32>
    %cst_6 = arith.constant dense<0xFF800000> : vector<10xf32>
    %10 = vector.multi_reduction <maximumf>, %9, %cst_6 [1] : vector<10x10xf32> to vector<10xf32>
    %11 = vector.shape_cast %10 : vector<10xf32> to vector<10x1xf32>
    %12 = vector.broadcast %11 : vector<10x1xf32> to vector<10x10xf32>
    %13 = arith.subf %9, %12 : vector<10x10xf32>
    %14 = math.exp %13 : vector<10x10xf32>
    %cst_7 = arith.constant dense<0.000000e+00> : vector<10xf32>
    %15 = vector.multi_reduction <add>, %14, %cst_7 [1] : vector<10x10xf32> to vector<10xf32>
    %16 = vector.shape_cast %15 : vector<10xf32> to vector<10x1xf32>
    %17 = tpu.reciprocal %16 {approx = true} : vector<10x1xf32> -> vector<10x1xf32>
    %18 = vector.broadcast %17 : vector<10x1xf32> to vector<10x10xf32>
    %19 = arith.mulf %14, %18 : vector<10x10xf32>
    %cst_8 = arith.constant dense<0.000000e+00> : vector<10x8xf32>
    %20 = tpu.matmul %19, %8, %cst_8 {dimension_numbers = #tpu.dot_dimension_numbers<[1], [0], [0], [1], [0, 0, 1, 1], [], []>} : vector<10x10xf32>, vector<10x8xf32>, vector<10x8xf32> -> vector<10x8xf32>
    %c0_9 = arith.constant 0 : index
    %c0_10 = arith.constant 0 : index
    %21 = vector.load %arg6[%c0_9, %c0_10] : memref<20x32xf32, #tpu.memory_space<vmem>>, vector<10x8xf32>
    tpu.vector_store %arg6[%c0_9, %c0_10], %20 {strides = array<i32>} : memref<20x32xf32, #tpu.memory_space<vmem>>, vector<10x8xf32>,
    %22 = vector.extract_strided_slice %5 {offsets = [0, 8], sizes = [10, 8], strides = [1, 1]} : vector<20x96xf32> to vector<10x8xf32>
    %23 = vector.extract_strided_slice %5 {offsets = [0, 40], sizes = [10, 8], strides = [1, 1]} : vector<20x96xf32> to vector<10x8xf32>
    %24 = vector.extract_strided_slice %5 {offsets = [0, 72], sizes = [10, 8], strides = [1, 1]} : vector<20x96xf32> to vector<10x8xf32>
    %cst_11 = arith.constant dense<0.000000e+00> : vector<10x10xf32>
    %25 = tpu.matmul %22, %23, %cst_11 {dimension_numbers = #tpu.dot_dimension_numbers<[1], [1], [0], [0], [0, 0, 1, 0], [], []>} : vector<10x8xf32>, vector<10x8xf32>, vector<10x10xf32> -> vector<10x10xf32>
    %cst_12 = arith.constant dense<0xFF800000> : vector<10xf32>
    %26 = vector.multi_reduction <maximumf>, %25, %cst_12 [1] : vector<10x10xf32> to vector<10xf32>
    %27 = vector.shape_cast %26 : vector<10xf32> to vector<10x1xf32>
    %28 = vector.broadcast %27 : vector<10x1xf32> to vector<10x10xf32>
    %29 = arith.subf %25, %28 : vector<10x10xf32>
    %30 = math.exp %29 : vector<10x10xf32>
    %cst_13 = arith.constant dense<0.000000e+00> : vector<10xf32>
    %31 = vector.multi_reduction <add>, %30, %cst_13 [1] : vector<10x10xf32> to vector<10xf32>
    %32 = vector.shape_cast %31 : vector<10xf32> to vector<10x1xf32>
    %33 = tpu.reciprocal %32 {approx = true} : vector<10x1xf32> -> vector<10x1xf32>
    %34 = vector.broadcast %33 : vector<10x1xf32> to vector<10x10xf32>
    %35 = arith.mulf %30, %34 : vector<10x10xf32>
    %cst_14 = arith.constant dense<0.000000e+00> : vector<10x8xf32>
    %36 = tpu.matmul %35, %24, %cst_14 {dimension_numbers = #tpu.dot_dimension_numbers<[1], [0], [0], [1], [0, 0, 1, 1], [], []>} : vector<10x10xf32>, vector<10x8xf32>, vector<10x8xf32> -> vector<10x8xf32>
    %c0_15 = arith.constant 0 : index
    %c8 = arith.constant 8 : index
    %37 = vector.load %arg6[%c0_15, %c8] : memref<20x32xf32, #tpu.memory_space<vmem>>, vector<10x8xf32>
    tpu.vector_store %arg6[%c0_15, %c8], %36 {strides = array<i32>} : memref<20x32xf32, #tpu.memory_space<vmem>>, vector<10x8xf32>,
    %38 = vector.extract_strided_slice %5 {offsets = [0, 16], sizes = [10, 8], strides = [1, 1]} : vector<20x96xf32> to vector<10x8xf32>
    %39 = vector.extract_strided_slice %5 {offsets = [0, 48], sizes = [10, 8], strides = [1, 1]} : vector<20x96xf32> to vector<10x8xf32>
    %40 = vector.extract_strided_slice %5 {offsets = [0, 80], sizes = [10, 8], strides = [1, 1]} : vector<20x96xf32> to vector<10x8xf32>
    %cst_16 = arith.constant dense<0.000000e+00> : vector<10x10xf32>
    %41 = tpu.matmul %38, %39, %cst_16 {dimension_numbers = #tpu.dot_dimension_numbers<[1], [1], [0], [0], [0, 0, 1, 0], [], []>} : vector<10x8xf32>, vector<10x8xf32>, vector<10x10xf32> -> vector<10x10xf32>
    %cst_17 = arith.constant dense<0xFF800000> : vector<10xf32>
    %42 = vector.multi_reduction <maximumf>, %41, %cst_17 [1] : vector<10x10xf32> to vector<10xf32>
    %43 = vector.shape_cast %42 : vector<10xf32> to vector<10x1xf32>
    %44 = vector.broadcast %43 : vector<10x1xf32> to vector<10x10xf32>
    %45 = arith.subf %41, %44 : vector<10x10xf32>
    %46 = math.exp %45 : vector<10x10xf32>
    %cst_18 = arith.constant dense<0.000000e+00> : vector<10xf32>
    %47 = vector.multi_reduction <add>, %46, %cst_18 [1] : vector<10x10xf32> to vector<10xf32>
    %48 = vector.shape_cast %47 : vector<10xf32> to vector<10x1xf32>
    %49 = tpu.reciprocal %48 {approx = true} : vector<10x1xf32> -> vector<10x1xf32>
    %50 = vector.broadcast %49 : vector<10x1xf32> to vector<10x10xf32>
    %51 = arith.mulf %46, %50 : vector<10x10xf32>
    %cst_19 = arith.constant dense<0.000000e+00> : vector<10x8xf32>
    %52 = tpu.matmul %51, %40, %cst_19 {dimension_numbers = #tpu.dot_dimension_numbers<[1], [0], [0], [1], [0, 0, 1, 1], [], []>} : vector<10x10xf32>, vector<10x8xf32>, vector<10x8xf32> -> vector<10x8xf32>
    %c0_20 = arith.constant 0 : index
    %c16 = arith.constant 16 : index
    %53 = vector.load %arg6[%c0_20, %c16] : memref<20x32xf32, #tpu.memory_space<vmem>>, vector<10x8xf32>
    tpu.vector_store %arg6[%c0_20, %c16], %52 {strides = array<i32>} : memref<20x32xf32, #tpu.memory_space<vmem>>, vector<10x8xf32>,
    %54 = vector.extract_strided_slice %5 {offsets = [0, 24], sizes = [10, 8], strides = [1, 1]} : vector<20x96xf32> to vector<10x8xf32>
    %55 = vector.extract_strided_slice %5 {offsets = [0, 56], sizes = [10, 8], strides = [1, 1]} : vector<20x96xf32> to vector<10x8xf32>
    %56 = vector.extract_strided_slice %5 {offsets = [0, 88], sizes = [10, 8], strides = [1, 1]} : vector<20x96xf32> to vector<10x8xf32>
    %cst_21 = arith.constant dense<0.000000e+00> : vector<10x10xf32>
    %57 = tpu.matmul %54, %55, %cst_21 {dimension_numbers = #tpu.dot_dimension_numbers<[1], [1], [0], [0], [0, 0, 1, 0], [], []>} : vector<10x8xf32>, vector<10x8xf32>, vector<10x10xf32> -> vector<10x10xf32>
    %cst_22 = arith.constant dense<0xFF800000> : vector<10xf32>
    %58 = vector.multi_reduction <maximumf>, %57, %cst_22 [1] : vector<10x10xf32> to vector<10xf32>
    %59 = vector.shape_cast %58 : vector<10xf32> to vector<10x1xf32>
    %60 = vector.broadcast %59 : vector<10x1xf32> to vector<10x10xf32>
    %61 = arith.subf %57, %60 : vector<10x10xf32>
    %62 = math.exp %61 : vector<10x10xf32>
    %cst_23 = arith.constant dense<0.000000e+00> : vector<10xf32>
    %63 = vector.multi_reduction <add>, %62, %cst_23 [1] : vector<10x10xf32> to vector<10xf32>
    %64 = vector.shape_cast %63 : vector<10xf32> to vector<10x1xf32>
    %65 = tpu.reciprocal %64 {approx = true} : vector<10x1xf32> -> vector<10x1xf32>
    %66 = vector.broadcast %65 : vector<10x1xf32> to vector<10x10xf32>
    %67 = arith.mulf %62, %66 : vector<10x10xf32>
    %cst_24 = arith.constant dense<0.000000e+00> : vector<10x8xf32>
    %68 = tpu.matmul %67, %56, %cst_24 {dimension_numbers = #tpu.dot_dimension_numbers<[1], [0], [0], [1], [0, 0, 1, 1], [], []>} : vector<10x10xf32>, vector<10x8xf32>, vector<10x8xf32> -> vector<10x8xf32>
    %c0_25 = arith.constant 0 : index
    %c24 = arith.constant 24 : index
    %69 = vector.load %arg6[%c0_25, %c24] : memref<20x32xf32, #tpu.memory_space<vmem>>, vector<10x8xf32>
    tpu.vector_store %arg6[%c0_25, %c24], %68 {strides = array<i32>} : memref<20x32xf32, #tpu.memory_space<vmem>>, vector<10x8xf32>,
    %70 = vector.extract_strided_slice %5 {offsets = [10, 0], sizes = [10, 8], strides = [1, 1]} : vector<20x96xf32> to vector<10x8xf32>
    %71 = vector.extract_strided_slice %5 {offsets = [10, 32], sizes = [10, 8], strides = [1, 1]} : vector<20x96xf32> to vector<10x8xf32>
    %72 = vector.extract_strided_slice %5 {offsets = [10, 64], sizes = [10, 8], strides = [1, 1]} : vector<20x96xf32> to vector<10x8xf32>
    %cst_26 = arith.constant dense<0.000000e+00> : vector<10x10xf32>
    %73 = tpu.matmul %70, %71, %cst_26 {dimension_numbers = #tpu.dot_dimension_numbers<[1], [1], [0], [0], [0, 0, 1, 0], [], []>} : vector<10x8xf32>, vector<10x8xf32>, vector<10x10xf32> -> vector<10x10xf32>
    %cst_27 = arith.constant dense<0xFF800000> : vector<10xf32>
    %74 = vector.multi_reduction <maximumf>, %73, %cst_27 [1] : vector<10x10xf32> to vector<10xf32>
    %75 = vector.shape_cast %74 : vector<10xf32> to vector<10x1xf32>
    %76 = vector.broadcast %75 : vector<10x1xf32> to vector<10x10xf32>
    %77 = arith.subf %73, %76 : vector<10x10xf32>
    %78 = math.exp %77 : vector<10x10xf32>
    %cst_28 = arith.constant dense<0.000000e+00> : vector<10xf32>
    %79 = vector.multi_reduction <add>, %78, %cst_28 [1] : vector<10x10xf32> to vector<10xf32>
    %80 = vector.shape_cast %79 : vector<10xf32> to vector<10x1xf32>
    %81 = tpu.reciprocal %80 {approx = true} : vector<10x1xf32> -> vector<10x1xf32>
    %82 = vector.broadcast %81 : vector<10x1xf32> to vector<10x10xf32>
    %83 = arith.mulf %78, %82 : vector<10x10xf32>
    %cst_29 = arith.constant dense<0.000000e+00> : vector<10x8xf32>
    %84 = tpu.matmul %83, %72, %cst_29 {dimension_numbers = #tpu.dot_dimension_numbers<[1], [0], [0], [1], [0, 0, 1, 1], [], []>} : vector<10x10xf32>, vector<10x8xf32>, vector<10x8xf32> -> vector<10x8xf32>
    %c10 = arith.constant 10 : index
    %c0_30 = arith.constant 0 : index
    %85 = vector.load %arg6[%c10, %c0_30] : memref<20x32xf32, #tpu.memory_space<vmem>>, vector<10x8xf32>
    tpu.vector_store %arg6[%c10, %c0_30], %84 {strides = array<i32>} : memref<20x32xf32, #tpu.memory_space<vmem>>, vector<10x8xf32>,
    %86 = vector.extract_strided_slice %5 {offsets = [10, 8], sizes = [10, 8], strides = [1, 1]} : vector<20x96xf32> to vector<10x8xf32>
    %87 = vector.extract_strided_slice %5 {offsets = [10, 40], sizes = [10, 8], strides = [1, 1]} : vector<20x96xf32> to vector<10x8xf32>
    %88 = vector.extract_strided_slice %5 {offsets = [10, 72], sizes = [10, 8], strides = [1, 1]} : vector<20x96xf32> to vector<10x8xf32>
    %cst_31 = arith.constant dense<0.000000e+00> : vector<10x10xf32>
    %89 = tpu.matmul %86, %87, %cst_31 {dimension_numbers = #tpu.dot_dimension_numbers<[1], [1], [0], [0], [0, 0, 1, 0], [], []>} : vector<10x8xf32>, vector<10x8xf32>, vector<10x10xf32> -> vector<10x10xf32>
    %cst_32 = arith.constant dense<0xFF800000> : vector<10xf32>
    %90 = vector.multi_reduction <maximumf>, %89, %cst_32 [1] : vector<10x10xf32> to vector<10xf32>
    %91 = vector.shape_cast %90 : vector<10xf32> to vector<10x1xf32>
    %92 = vector.broadcast %91 : vector<10x1xf32> to vector<10x10xf32>
    %93 = arith.subf %89, %92 : vector<10x10xf32>
    %94 = math.exp %93 : vector<10x10xf32>
    %cst_33 = arith.constant dense<0.000000e+00> : vector<10xf32>
    %95 = vector.multi_reduction <add>, %94, %cst_33 [1] : vector<10x10xf32> to vector<10xf32>
    %96 = vector.shape_cast %95 : vector<10xf32> to vector<10x1xf32>
    %97 = tpu.reciprocal %96 {approx = true} : vector<10x1xf32> -> vector<10x1xf32>
    %98 = vector.broadcast %97 : vector<10x1xf32> to vector<10x10xf32>
    %99 = arith.mulf %94, %98 : vector<10x10xf32>
    %cst_34 = arith.constant dense<0.000000e+00> : vector<10x8xf32>
    %100 = tpu.matmul %99, %88, %cst_34 {dimension_numbers = #tpu.dot_dimension_numbers<[1], [0], [0], [1], [0, 0, 1, 1], [], []>} : vector<10x10xf32>, vector<10x8xf32>, vector<10x8xf32> -> vector<10x8xf32>
    %c10_35 = arith.constant 10 : index
    %c8_36 = arith.constant 8 : index
    %101 = vector.load %arg6[%c10_35, %c8_36] : memref<20x32xf32, #tpu.memory_space<vmem>>, vector<10x8xf32>
    tpu.vector_store %arg6[%c10_35, %c8_36], %100 {strides = array<i32>} : memref<20x32xf32, #tpu.memory_space<vmem>>, vector<10x8xf32>,
    %102 = vector.extract_strided_slice %5 {offsets = [10, 16], sizes = [10, 8], strides = [1, 1]} : vector<20x96xf32> to vector<10x8xf32>
    %103 = vector.extract_strided_slice %5 {offsets = [10, 48], sizes = [10, 8], strides = [1, 1]} : vector<20x96xf32> to vector<10x8xf32>
    %104 = vector.extract_strided_slice %5 {offsets = [10, 80], sizes = [10, 8], strides = [1, 1]} : vector<20x96xf32> to vector<10x8xf32>
    %cst_37 = arith.constant dense<0.000000e+00> : vector<10x10xf32>
    %105 = tpu.matmul %102, %103, %cst_37 {dimension_numbers = #tpu.dot_dimension_numbers<[1], [1], [0], [0], [0, 0, 1, 0], [], []>} : vector<10x8xf32>, vector<10x8xf32>, vector<10x10xf32> -> vector<10x10xf32>
    %cst_38 = arith.constant dense<0xFF800000> : vector<10xf32>
    %106 = vector.multi_reduction <maximumf>, %105, %cst_38 [1] : vector<10x10xf32> to vector<10xf32>
    %107 = vector.shape_cast %106 : vector<10xf32> to vector<10x1xf32>
    %108 = vector.broadcast %107 : vector<10x1xf32> to vector<10x10xf32>
    %109 = arith.subf %105, %108 : vector<10x10xf32>
    %110 = math.exp %109 : vector<10x10xf32>
    %cst_39 = arith.constant dense<0.000000e+00> : vector<10xf32>
    %111 = vector.multi_reduction <add>, %110, %cst_39 [1] : vector<10x10xf32> to vector<10xf32>
    %112 = vector.shape_cast %111 : vector<10xf32> to vector<10x1xf32>
    %113 = tpu.reciprocal %112 {approx = true} : vector<10x1xf32> -> vector<10x1xf32>
    %114 = vector.broadcast %113 : vector<10x1xf32> to vector<10x10xf32>
    %115 = arith.mulf %110, %114 : vector<10x10xf32>
    %cst_40 = arith.constant dense<0.000000e+00> : vector<10x8xf32>
    %116 = tpu.matmul %115, %104, %cst_40 {dimension_numbers = #tpu.dot_dimension_numbers<[1], [0], [0], [1], [0, 0, 1, 1], [], []>} : vector<10x10xf32>, vector<10x8xf32>, vector<10x8xf32> -> vector<10x8xf32>
    %c10_41 = arith.constant 10 : index
    %c16_42 = arith.constant 16 : index
    %117 = vector.load %arg6[%c10_41, %c16_42] : memref<20x32xf32, #tpu.memory_space<vmem>>, vector<10x8xf32>
    tpu.vector_store %arg6[%c10_41, %c16_42], %116 {strides = array<i32>} : memref<20x32xf32, #tpu.memory_space<vmem>>, vector<10x8xf32>,
    %118 = vector.extract_strided_slice %5 {offsets = [10, 24], sizes = [10, 8], strides = [1, 1]} : vector<20x96xf32> to vector<10x8xf32>
    %119 = vector.extract_strided_slice %5 {offsets = [10, 56], sizes = [10, 8], strides = [1, 1]} : vector<20x96xf32> to vector<10x8xf32>
    %120 = vector.extract_strided_slice %5 {offsets = [10, 88], sizes = [10, 8], strides = [1, 1]} : vector<20x96xf32> to vector<10x8xf32>
    %cst_43 = arith.constant dense<0.000000e+00> : vector<10x10xf32>
    %121 = tpu.matmul %118, %119, %cst_43 {dimension_numbers = #tpu.dot_dimension_numbers<[1], [1], [0], [0], [0, 0, 1, 0], [], []>} : vector<10x8xf32>, vector<10x8xf32>, vector<10x10xf32> -> vector<10x10xf32>
    %cst_44 = arith.constant dense<0xFF800000> : vector<10xf32>
    %122 = vector.multi_reduction <maximumf>, %121, %cst_44 [1] : vector<10x10xf32> to vector<10xf32>
    %123 = vector.shape_cast %122 : vector<10xf32> to vector<10x1xf32>
    %124 = vector.broadcast %123 : vector<10x1xf32> to vector<10x10xf32>
    %125 = arith.subf %121, %124 : vector<10x10xf32>
    %126 = math.exp %125 : vector<10x10xf32>
    %cst_45 = arith.constant dense<0.000000e+00> : vector<10xf32>
    %127 = vector.multi_reduction <add>, %126, %cst_45 [1] : vector<10x10xf32> to vector<10xf32>
    %128 = vector.shape_cast %127 : vector<10xf32> to vector<10x1xf32>
    %129 = tpu.reciprocal %128 {approx = true} : vector<10x1xf32> -> vector<10x1xf32>
    %130 = vector.broadcast %129 : vector<10x1xf32> to vector<10x10xf32>
    %131 = arith.mulf %126, %130 : vector<10x10xf32>
    %cst_46 = arith.constant dense<0.000000e+00> : vector<10x8xf32>
    %132 = tpu.matmul %131, %120, %cst_46 {dimension_numbers = #tpu.dot_dimension_numbers<[1], [0], [0], [1], [0, 0, 1, 1], [], []>} : vector<10x10xf32>, vector<10x8xf32>, vector<10x8xf32> -> vector<10x8xf32>
    %c10_47 = arith.constant 10 : index
    %c24_48 = arith.constant 24 : index
    %133 = vector.load %arg6[%c10_47, %c24_48] : memref<20x32xf32, #tpu.memory_space<vmem>>, vector<10x8xf32>
    tpu.vector_store %arg6[%c10_47, %c24_48], %132 {strides = array<i32>} : memref<20x32xf32, #tpu.memory_space<vmem>>, vector<10x8xf32>,
    %c0_49 = arith.constant 0 : index
    %c0_50 = arith.constant 0 : index
    %134 = vector.load %arg6[%c0_49, %c0_50] : memref<20x32xf32, #tpu.memory_space<vmem>>, vector<20x32xf32>
    %c0_51 = arith.constant 0 : index
    %c0_52 = arith.constant 0 : index
    %135 = vector.load %arg3[%c0_51, %c0_52] : memref<32x32xf32, #tpu.memory_space<vmem>>, vector<32x32xf32>
    %cst_53 = arith.constant dense<0.000000e+00> : vector<20x32xf32>
    %136 = tpu.matmul %134, %135, %cst_53 {dimension_numbers = #tpu.dot_dimension_numbers<[1], [0], [0], [1], [0, 0, 1, 1], [], []>} : vector<20x32xf32>, vector<32x32xf32>, vector<20x32xf32> -> vector<20x32xf32>
    %c0_54 = arith.constant 0 : index
    %c0_55 = arith.constant 0 : index
    %137 = vector.load %arg4[%c0_54, %c0_55] : memref<1x32xf32, #tpu.memory_space<vmem>>, vector<1x32xf32>
    %138 = vector.broadcast %137 : vector<1x32xf32> to vector<20x32xf32>
    %139 = arith.addf %136, %138 : vector<20x32xf32>
    %c0_56 = arith.constant 0 : index
    %c0_57 = arith.constant 0 : index
    %140 = vector.load %arg5[%c0_56, %c0_57] : memref<20x32xf32, #tpu.memory_space<vmem>>, vector<20x32xf32>
    tpu.vector_store %arg5[%c0_56, %c0_57], %139 {strides = array<i32>} : memref<20x32xf32, #tpu.memory_space<vmem>>, vector<20x32xf32>,
    return
  }
}

</mosaic_0001>

<llo_original>
// kernel: tpu_custom_call.1
$region0: #{tpu_custom_call.1}
  #allocation0 [shape = 'u32[]', space=smem, size = 0x4, offset = 0x4, fixed_abs, tag = 'smem constant byte address 0x4 - core index']
  #allocation1 [shape = 'u32[144,128]{1,0:T(1,128)}', space=vmem, size = 0x12000, scoped, tag = 'internal scratch']
  #allocation2 [shape = 'f32[20,32]{1,0:T(8,128)}', space=vmem, size = 0x3000, scoped, tag = 'scratch operand']
  %s0 = inlined_call_operand.hbm [shape: f32[20,96], index: 0, kind: input, shape index: {}]
  %s1 = inlined_call_operand.hbm [shape: f32[96,96], index: 1, kind: input, shape index: {}]
  %s2 = inlined_call_operand.vmem [shape: f32[1,96], index: 2, kind: input, shape index: {}]
  %s3 = inlined_call_operand.hbm [shape: f32[32,32], index: 3, kind: input, shape index: {}]
  %s4 = inlined_call_operand.vmem [shape: f32[1,32], index: 4, kind: input, shape index: {}]
  %s5 = inlined_call_operand.hbm [shape: f32[20,32], index: 5, kind: output, shape index: {}]
  %s6 = sld [smem:[#allocation0]]
  $region42: #{tpu_custom_call.1} parent=0
    _
  %s8 = ssub.s32 1, %s6
  %s9 = scalar_select 0, %s8, %s6
  $region1: #{tpu_custom_call.1} parent=0
    #allocation3 [shape = 'u8[12288]{0}', space=vmem, size = 0x3000, scoped, tag = 'input window, operand 0, single buffered']
    #allocation4 [shape = 's32[1]{0}', space=sflag, size = 0x4, scoped, tag = 'scoped memory for tpu_custom_call.1']
    #allocation5 [shape = 's32[1]{0}', space=sflag, size = 0x4, scoped, tag = 'scoped memory for tpu_custom_call.1']
    #allocation6 [shape = 'u8[49152]{0}', space=vmem, size = 0xc000, scoped, tag = 'input window, operand 1, single buffered']
    #allocation7 [shape = 's32[1]{0}', space=sflag, size = 0x4, scoped, tag = 'scoped memory for tpu_custom_call.1']
    #allocation8 [shape = 'u8[16384]{0}', space=vmem, size = 0x4000, scoped, tag = 'input window, operand 3, single buffered']
    #allocation9 [shape = 'u8[12288]{0}', space=vmem, size = 0x3000, scoped, tag = 'output window, operand 0, single buffered']
    %10 = vsyncpa [#allocation4], 0
    %11 = vsyncpa [#allocation7], 0
    %12 = vsyncpa [#allocation5], 0
    // Predicated region
    $region2: #{tpu_custom_call.1} parent=1 // pred_check
      _
    $region3: #{tpu_custom_call.1} parent=1 // pred_check_branch
      %14 = sbr.rel (0) target = $region5
    $region4: #{tpu_custom_call.1} parent=1 // pred_region
      %s16 = ssub.s32 384, 384
      %17 = vsyncadd [#allocation4], %s16
      %s18 = sshll.u32 [#allocation3], 4
      %s19 = int_to_ptr.vmem [resolvable:$true] %s18
      %24 = dma.hbm_to_vmem [thread:$0]  %s0, 384, %s19, [#allocation4], 128, 128, 8
    $region5: #{tpu_custom_call.1} parent=1 // pred_fallthru
      _
    // Predicated region
    $region6: #{tpu_custom_call.1} parent=1 // pred_check
      _
    $region7: #{tpu_custom_call.1} parent=1 // pred_check_branch
      %26 = sbr.rel (0) target = $region9
    $region8: #{tpu_custom_call.1} parent=1 // pred_region
      %s28 = ssub.s32 1536, 1536
      %29 = vsyncadd [#allocation7], %s28
      %s30 = sshll.u32 [#allocation6], 4
      %s31 = int_to_ptr.vmem [resolvable:$true] %s30
      %36 = dma.hbm_to_vmem [thread:$0]  %s1, 1536, %s31, [#allocation7], 128, 128, 8
    $region9: #{tpu_custom_call.1} parent=1 // pred_fallthru
      _
    // Predicated region
    $region10: #{tpu_custom_call.1} parent=1 // pred_check
      _
    $region11: #{tpu_custom_call.1} parent=1 // pred_check_branch
      %38 = sbr.rel (0) target = $region13
    $region12: #{tpu_custom_call.1} parent=1 // pred_region
      _
    $region13: #{tpu_custom_call.1} parent=1 // pred_fallthru
      _
    // Predicated region
    $region14: #{tpu_custom_call.1} parent=1 // pred_check
      _
    $region15: #{tpu_custom_call.1} parent=1 // pred_check_branch
      %40 = sbr.rel (0) target = $region17
    $region16: #{tpu_custom_call.1} parent=1 // pred_region
      %s42 = ssub.s32 512, 512
      %43 = vsyncadd [#allocation7], %s42
      %s44 = sshll.u32 [#allocation8], 4
      %s45 = int_to_ptr.vmem [resolvable:$true] %s44
      %50 = dma.hbm_to_vmem [thread:$0]  %s3, 512, %s45, [#allocation7], 128, 128, 8
    $region17: #{tpu_custom_call.1} parent=1 // pred_fallthru
      _
    // Predicated region
    $region18: #{tpu_custom_call.1} parent=1 // pred_check
      _
    $region19: #{tpu_custom_call.1} parent=1 // pred_check_branch
      %52 = sbr.rel (0) target = $region21
    $region20: #{tpu_custom_call.1} parent=1 // pred_region
      _
    $region21: #{tpu_custom_call.1} parent=1 // pred_fallthru
      _
    // Predicated region
    $region22: #{tpu_custom_call.1} parent=1 // pred_check
      _
    $region23: #{tpu_custom_call.1} parent=1 // pred_check_branch
      %54 = sbr.rel (0) target = $region25
    $region24: #{tpu_custom_call.1} parent=1 // pred_region
      %55 = dma.done [#allocation4], 384
    $region25: #{tpu_custom_call.1} parent=1 // pred_fallthru
      _
    // Predicated region
    $region26: #{tpu_custom_call.1} parent=1 // pred_check
      _
    $region27: #{tpu_custom_call.1} parent=1 // pred_check_branch
      %57 = sbr.rel (0) target = $region29
    $region28: #{tpu_custom_call.1} parent=1 // pred_region
      %58 = dma.done [#allocation7], 1536
    $region29: #{tpu_custom_call.1} parent=1 // pred_fallthru
      _
    // Predicated region
    $region30: #{tpu_custom_call.1} parent=1 // pred_check
      _
    $region31: #{tpu_custom_call.1} parent=1 // pred_check_branch
      %60 = sbr.rel (0) target = $region33
    $region32: #{tpu_custom_call.1} parent=1 // pred_region
      %61 = dma.done [#allocation7], 512
    $region33: #{tpu_custom_call.1} parent=1 // pred_fallthru
      _
    %v62 = vld [vmem:[#allocation3] sm:$0xff]
    %v63 = vld [vmem:[#allocation3 + $0x8] sm:$0xff]
    %v64 = vld [vmem:[#allocation3 + $0x10] sm:$0xf]
    %v65 = vld [vmem:[#allocation6] sm:$0xff]
    %v66 = vld [vmem:[#allocation6 + $0x8] sm:$0xff]
    %v67 = vld [vmem:[#allocation6 + $0x10] sm:$0xff]
    %v68 = vld [vmem:[#allocation6 + $0x18] sm:$0xff]
    %v69 = vld [vmem:[#allocation6 + $0x20] sm:$0xff]
    %v70 = vld [vmem:[#allocation6 + $0x28] sm:$0xff]
    %v71 = vld [vmem:[#allocation6 + $0x30] sm:$0xff]
    %v72 = vld [vmem:[#allocation6 + $0x38] sm:$0xff]
    %v73 = vld [vmem:[#allocation6 + $0x40] sm:$0xff]
    %v74 = vld [vmem:[#allocation6 + $0x48] sm:$0xff]
    %v75 = vld [vmem:[#allocation6 + $0x50] sm:$0xff]
    %v76 = vld [vmem:[#allocation6 + $0x58] sm:$0xff]
    %v77 = vld [vmem:[%s2] sm:$0x1]
    %v79 = vlaneseq
    %v80 = vshrl.u32 %v79, 7
    %v81 = vsub.s32 0, %v80
    %v82 = vrot.slane %v77, %v81
    %vm84 = vcmask 785408
    %v86 = vsel %vm84, %v62, 0
    %v89 = vsel %vm84, %v63, 0
    %v92 = vsel %vm84, %v64, 0
    %94 = vmatprep.subr.mxu0 0.0
    %95 = vmatpush1.msra.mxu0 0.0
    %96 = vmatprep.subr.mxu0 0.0
    %97 = vmatpush1.msra.mxu0 0.0
    %98 = vmatprep.subr.mxu0 0.0
    %99 = vmatpush1.msra.mxu0 0.0
    %100 = vmatprep.subr.mxu0 0.0
    %101 = vmatpush1.msra.mxu0 0.0
    %102 = vmatprep.subr.mxu0 0.0
    %103 = vmatpush1.msra.mxu0 %v76
    %104 = vmatprep.subr.mxu0 0.0
    %105 = vmatpush1.msra.mxu0 %v75
    %106 = vmatprep.subr.mxu0 0.0
    %107 = vmatpush1.msra.mxu0 %v74
    %108 = vmatprep.subr.mxu0 0.0
    %109 = vmatpush1.msra.mxu0 %v73
    %110 = vmatprep.subr.mxu0 0.0
    %111 = vmatpush1.msra.mxu0 %v72
    %112 = vmatprep.subr.mxu0 0.0
    %113 = vmatpush1.msra.mxu0 %v71
    %114 = vmatprep.subr.mxu0 0.0
    %115 = vmatpush1.msra.mxu0 %v70
    %116 = vmatprep.subr.mxu0 0.0
    %117 = vmatpush1.msra.mxu0 %v69
    %118 = vmatprep.subr.mxu0 0.0
    %119 = vmatpush1.msra.mxu0 %v68
    %120 = vmatprep.subr.mxu0 0.0
    %121 = vmatpush1.msra.mxu0 %v67
    %122 = vmatprep.subr.mxu0 0.0
    %123 = vmatpush1.msra.mxu0 %v66
    %124 = vmatprep.subr.mxu0 0.0
    %125 = vmatpush1.msra.mxu0 %v65
    %126 = vmatprep.subr.mxu0 0.0
    %127 = vmatpush2.msra.mxu0 0.0
    %128 = vmatprep.subr.mxu0 0.0
    %129 = vmatpush2.msra.mxu0 0.0
    %130 = vmatprep.subr.mxu0 0.0
    %131 = vmatpush2.msra.mxu0 0.0
    %132 = vmatprep.subr.mxu0 0.0
    %133 = vmatpush2.msra.mxu0 0.0
    %134 = vmatprep.subr.mxu0 0.0
    %135 = vmatpush2.msra.mxu0 0.0
    %136 = vmatprep.subr.mxu0 0.0
    %137 = vmatpush2.msra.mxu0 0.0
    %138 = vmatprep.subr.mxu0 0.0
    %139 = vmatpush2.msra.mxu0 0.0
    %140 = vmatprep.subr.mxu0 0.0
    %141 = vmatpush2.msra.mxu0 0.0
    %142 = vmatprep.subr.mxu0 0.0
    %143 = vmatpush2.msra.mxu0 0.0
    %144 = vmatprep.subr.mxu0 0.0
    %145 = vmatpush2.msra.mxu0 0.0
    %146 = vmatprep.subr.mxu0 0.0
    %147 = vmatpush2.msra.mxu0 0.0
    %148 = vmatprep.subr.mxu0 0.0
    %149 = vmatpush2.msra.mxu0 0.0
    %150 = vmatprep.subr.mxu0 0.0
    %151 = vmatpush2.msra.mxu0 0.0
    %152 = vmatprep.subr.mxu0 0.0
    %153 = vmatpush2.msra.mxu0 0.0
    %154 = vmatprep.subr.mxu0 0.0
    %155 = vmatpush2.msra.mxu0 0.0
    %156 = vmatprep.subr.mxu0 0.0
    %157 = vmatpush2.msra.mxu0 0.0
    %158 = vmatprep.mubr.f32.mxu0 0.0
    %159 = vmatmul.mubr.f32.gmra.mxu0 %v86
    %v160 = vpop.f32.mrf.mxu0
    %v161 = vadd.f32 %v82, %v160
    %v162 = vpop.f32.mrf.mxu0
    %163 = vmatprep.mubr.f32.mxu0 0.0
    %164 = vmatmul.mubr.f32.gmra.mxu0 %v89
    %v165 = vpop.f32.mrf.mxu0
    %v166 = vadd.f32 %v82, %v165
    %v167 = vpop.f32.mrf.mxu0
    %168 = vmatprep.mubr.f32.mxu0 0.0
    %169 = vmatmul.mubr.f32.gmra.mxu0 %v92
    %v170 = vpop.f32.mrf.mxu0
    %v171 = vadd.f32 %v82, %v170
    %v172 = vpop.f32.mrf.mxu0
    %173 = vdwg.mxu0
    %176 = vrot.lane.b32.xlu0 %v161, 96
    %v177 = vpop.permute.xlu0 %176
    %178 = vrot.lane.b32.xlu0 %v166, 96
    %v179 = vpop.permute.xlu0 %178
    %vm180 = vcmask 64512
    %v181 = vsel %vm180, %v161, 0
    %v183 = vsel %vm180, %v166, 0
    %v185 = vsel %vm180, %v177, 0
    %v187 = vsel %vm180, %v179, 0
    %189 = vmatprep.subr.mxu0 0.0
    %190 = vmatpush1.xpose.msra.mxu0 0.0
    %191 = vmatprep.subr.mxu0 0.0
    %192 = vmatpush1.xpose.msra.mxu0 0.0
    %193 = vmatprep.subr.mxu0 0.0
    %194 = vmatpush1.xpose.msra.mxu0 0.0
    %195 = vmatprep.subr.mxu0 0.0
    %196 = vmatpush1.xpose.msra.mxu0 0.0
    %197 = vmatprep.subr.mxu0 0.0
    %198 = vmatpush1.xpose.msra.mxu0 0.0
    %199 = vmatprep.subr.mxu0 0.0
    %200 = vmatpush1.xpose.msra.mxu0 0.0
    %201 = vmatprep.subr.mxu0 0.0
    %202 = vmatpush1.xpose.msra.mxu0 0.0
    %203 = vmatprep.subr.mxu0 0.0
    %204 = vmatpush1.xpose.msra.mxu0 0.0
    %205 = vmatprep.subr.mxu0 0.0
    %206 = vmatpush1.xpose.msra.mxu0 0.0
    %207 = vmatprep.subr.mxu0 0.0
    %208 = vmatpush1.xpose.msra.mxu0 0.0
    %209 = vmatprep.subr.mxu0 0.0
    %210 = vmatpush1.xpose.msra.mxu0 0.0
    %211 = vmatprep.subr.mxu0 0.0
    %212 = vmatpush1.xpose.msra.mxu0 0.0
    %213 = vmatprep.subr.mxu0 0.0
    %214 = vmatpush1.xpose.msra.mxu0 0.0
    %215 = vmatprep.subr.mxu0 0.0
    %216 = vmatpush1.xpose.msra.mxu0 0.0
    %217 = vmatprep.subr.mxu0 0.0
    %218 = vmatpush1.xpose.msra.mxu0 %v187
    %219 = vmatprep.subr.mxu0 0.0
    %220 = vmatpush1.xpose.msra.mxu0 %v185
    %221 = vmatprep.subr.mxu0 0.0
    %222 = vmatpush2.xpose.msra.mxu0 0.0
    %223 = vmatprep.subr.mxu0 0.0
    %224 = vmatpush2.xpose.msra.mxu0 0.0
    %225 = vmatprep.subr.mxu0 0.0
    %226 = vmatpush2.xpose.msra.mxu0 0.0
    %227 = vmatprep.subr.mxu0 0.0
    %228 = vmatpush2.xpose.msra.mxu0 0.0
    %229 = vmatprep.subr.mxu0 0.0
    %230 = vmatpush2.xpose.msra.mxu0 0.0
    %231 = vmatprep.subr.mxu0 0.0
    %232 = vmatpush2.xpose.msra.mxu0 0.0
    %233 = vmatprep.subr.mxu0 0.0
    %234 = vmatpush2.xpose.msra.mxu0 0.0
    %235 = vmatprep.subr.mxu0 0.0
    %236 = vmatpush2.xpose.msra.mxu0 0.0
    %237 = vmatprep.subr.mxu0 0.0
    %238 = vmatpush2.xpose.msra.mxu0 0.0
    %239 = vmatprep.subr.mxu0 0.0
    %240 = vmatpush2.xpose.msra.mxu0 0.0
    %241 = vmatprep.subr.mxu0 0.0
    %242 = vmatpush2.xpose.msra.mxu0 0.0
    %243 = vmatprep.subr.mxu0 0.0
    %244 = vmatpush2.xpose.msra.mxu0 0.0
    %245 = vmatprep.subr.mxu0 0.0
    %246 = vmatpush2.xpose.msra.mxu0 0.0
    %247 = vmatprep.subr.mxu0 0.0
    %248 = vmatpush2.xpose.msra.mxu0 0.0
    %249 = vmatprep.subr.mxu0 0.0
    %250 = vmatpush2.xpose.msra.mxu0 0.0
    %251 = vmatprep.subr.mxu0 0.0
    %252 = vmatpush2.xpose.msra.mxu0 0.0
    %253 = vmatprep.mubr.f32.mxu0 0.0
    %254 = vmatmul.mubr.f32.gmra.mxu0 %v181
    %v255 = vpop.f32.mrf.mxu0
    %v256 = vadd.f32 0.0, %v255
    %v257 = vpop.f32.mrf.mxu0
    %258 = vmatprep.mubr.f32.mxu0 0.0
    %259 = vmatmul.mubr.f32.gmra.mxu0 %v183
    %v260 = vpop.f32.mrf.mxu0
    %v261 = vadd.f32 0.0, %v260
    %v262 = vpop.f32.mrf.mxu0
    %263 = vdwg.mxu0
    %vm264 = vcmask 80896
    %v265 = vsel %vm264, %v256, -inf
    %266 = vmax.xlane.f32.xlu0 %v265
    %v267 = vpop.xlane.xlu0 %266
    %vm268 = vcmask 74752
    %v269 = vsel %vm268, %v261, -inf
    %270 = vmax.xlane.f32.xlu0 %v269
    %v271 = vpop.xlane.xlu0 %270
    %v272 = vsub.f32 %v256, %v267
    %v273 = vsub.f32 %v261, %v271
    %v274 = vmul.f32 %v272, 1.442695
    %v275 = vpow.pop %v274
    %v276 = vmul.f32 %v273, 1.442695
    %v277 = vpow.pop %v276
    %v278 = vsel %vm264, %v275, 0.0
    %279 = vadd.xlane.f32.xlu0 %v278
    %v280 = vpop.xlane.xlu0 %279
    %v281 = vsel %vm268, %v277, 0.0
    %282 = vadd.xlane.f32.xlu0 %v281
    %v283 = vpop.xlane.xlu0 %282
    %v284 = vrcp.pop %v280
    %v285 = vrcp.pop %v283
    %v286 = vmul.f32 %v275, %v284
    %v287 = vmul.f32 %v277, %v285
    %288 = vrot.lane.b32.xlu0 %v161, 64
    %v289 = vpop.permute.xlu0 %288
    %290 = vrot.lane.b32.xlu0 %v166, 64
    %v291 = vpop.permute.xlu0 %290
    %v294 = vsel %vm264, %v286, 0
    %v297 = vsel %vm264, %v287, 0
    %vm299 = vcmask 1041408
    %v300 = vsel %vm299, %v291, 0
    %302 = vmatprep.subr.mxu0 0.0
    %303 = vmatpush1.msra.mxu0 0.0
    %304 = vmatprep.subr.mxu0 0.0
    %305 = vmatpush1.msra.mxu0 0.0
    %306 = vmatprep.subr.mxu0 0.0
    %307 = vmatpush1.msra.mxu0 0.0
    %308 = vmatprep.subr.mxu0 0.0
    %309 = vmatpush1.msra.mxu0 0.0
    %310 = vmatprep.subr.mxu0 0.0
    %311 = vmatpush1.msra.mxu0 0.0
    %312 = vmatprep.subr.mxu0 0.0
    %313 = vmatpush1.msra.mxu0 0.0
    %314 = vmatprep.subr.mxu0 0.0
    %315 = vmatpush1.msra.mxu0 0.0
    %316 = vmatprep.subr.mxu0 0.0
    %317 = vmatpush1.msra.mxu0 0.0
    %318 = vmatprep.subr.mxu0 0.0
    %319 = vmatpush1.msra.mxu0 0.0
    %320 = vmatprep.subr.mxu0 0.0
    %321 = vmatpush1.msra.mxu0 0.0
    %322 = vmatprep.subr.mxu0 0.0
    %323 = vmatpush1.msra.mxu0 0.0
    %324 = vmatprep.subr.mxu0 0.0
    %325 = vmatpush1.msra.mxu0 0.0
    %326 = vmatprep.subr.mxu0 0.0
    %327 = vmatpush1.msra.mxu0 0.0
    %328 = vmatprep.subr.mxu0 0.0
    %329 = vmatpush1.msra.mxu0 0.0
    %330 = vmatprep.subr.mxu0 0.0
    %331 = vmatpush1.msra.mxu0 %v300
    %332 = vmatprep.subr.mxu0 0.0
    %333 = vmatpush1.msra.mxu0 %v289
    %334 = vmatprep.subr.mxu0 0.0
    %335 = vmatpush2.msra.mxu0 0.0
    %336 = vmatprep.subr.mxu0 0.0
    %337 = vmatpush2.msra.mxu0 0.0
    %338 = vmatprep.subr.mxu0 0.0
    %339 = vmatpush2.msra.mxu0 0.0
    %340 = vmatprep.subr.mxu0 0.0
    %341 = vmatpush2.msra.mxu0 0.0
    %342 = vmatprep.subr.mxu0 0.0
    %343 = vmatpush2.msra.mxu0 0.0
    %344 = vmatprep.subr.mxu0 0.0
    %345 = vmatpush2.msra.mxu0 0.0
    %346 = vmatprep.subr.mxu0 0.0
    %347 = vmatpush2.msra.mxu0 0.0
    %348 = vmatprep.subr.mxu0 0.0
    %349 = vmatpush2.msra.mxu0 0.0
    %350 = vmatprep.subr.mxu0 0.0
    %351 = vmatpush2.msra.mxu0 0.0
    %352 = vmatprep.subr.mxu0 0.0
    %353 = vmatpush2.msra.mxu0 0.0
    %354 = vmatprep.subr.mxu0 0.0
    %355 = vmatpush2.msra.mxu0 0.0
    %356 = vmatprep.subr.mxu0 0.0
    %357 = vmatpush2.msra.mxu0 0.0
    %358 = vmatprep.subr.mxu0 0.0
    %359 = vmatpush2.msra.mxu0 0.0
    %360 = vmatprep.subr.mxu0 0.0
    %361 = vmatpush2.msra.mxu0 0.0
    %362 = vmatprep.subr.mxu0 0.0
    %363 = vmatpush2.msra.mxu0 0.0
    %364 = vmatprep.subr.mxu0 0.0
    %365 = vmatpush2.msra.mxu0 0.0
    %366 = vmatprep.mubr.f32.mxu0 0.0
    %367 = vmatmul.mubr.f32.gmra.mxu0 %v294
    %v368 = vpop.f32.mrf.mxu0
    %v369 = vadd.f32 0.0, %v368
    %v370 = vpop.f32.mrf.mxu0
    %371 = vmatprep.mubr.f32.mxu0 0.0
    %372 = vmatmul.mubr.f32.gmra.mxu0 %v297
    %v373 = vpop.f32.mrf.mxu0
    %v374 = vadd.f32 0.0, %v373
    %v375 = vpop.f32.mrf.mxu0
    %376 = vdwg.mxu0
    %377 = vst.msk [vmem:[#allocation2] sm:$0xff] %vm180, %v369
    %vm378 = vcmask 58368
    %379 = vst.msk [vmem:[#allocation2 + $0x8] sm:$0x3] %vm378, %v374
    %380 = vrot.lane.b32.xlu0 %v161, 120
    %v381 = vpop.permute.xlu0 %380
    %382 = vrot.lane.b32.xlu0 %v166, 120
    %v383 = vpop.permute.xlu0 %382
    %384 = vrot.lane.b32.xlu0 %v161, 88
    %v385 = vpop.permute.xlu0 %384
    %386 = vrot.lane.b32.xlu0 %v166, 88
    %v387 = vpop.permute.xlu0 %386
    %v388 = vsel %vm180, %v381, 0
    %v390 = vsel %vm180, %v383, 0
    %v392 = vsel %vm180, %v385, 0
    %v394 = vsel %vm180, %v387, 0
    %396 = vmatprep.subr.mxu0 0.0
    %397 = vmatpush1.xpose.msra.mxu0 0.0
    %398 = vmatprep.subr.mxu0 0.0
    %399 = vmatpush1.xpose.msra.mxu0 0.0
    %400 = vmatprep.subr.mxu0 0.0
    %401 = vmatpush1.xpose.msra.mxu0 0.0
    %402 = vmatprep.subr.mxu0 0.0
    %403 = vmatpush1.xpose.msra.mxu0 0.0
    %404 = vmatprep.subr.mxu0 0.0
    %405 = vmatpush1.xpose.msra.mxu0 0.0
    %406 = vmatprep.subr.mxu0 0.0
    %407 = vmatpush1.xpose.msra.mxu0 0.0
    %408 = vmatprep.subr.mxu0 0.0
    %409 = vmatpush1.xpose.msra.mxu0 0.0
    %410 = vmatprep.subr.mxu0 0.0
    %411 = vmatpush1.xpose.msra.mxu0 0.0
    %412 = vmatprep.subr.mxu0 0.0
    %413 = vmatpush1.xpose.msra.mxu0 0.0
    %414 = vmatprep.subr.mxu0 0.0
    %415 = vmatpush1.xpose.msra.mxu0 0.0
    %416 = vmatprep.subr.mxu0 0.0
    %417 = vmatpush1.xpose.msra.mxu0 0.0
    %418 = vmatprep.subr.mxu0 0.0
    %419 = vmatpush1.xpose.msra.mxu0 0.0
    %420 = vmatprep.subr.mxu0 0.0
    %421 = vmatpush1.xpose.msra.mxu0 0.0
    %422 = vmatprep.subr.mxu0 0.0
    %423 = vmatpush1.xpose.msra.mxu0 0.0
    %424 = vmatprep.subr.mxu0 0.0
    %425 = vmatpush1.xpose.msra.mxu0 %v394
    %426 = vmatprep.subr.mxu0 0.0
    %427 = vmatpush1.xpose.msra.mxu0 %v392
    %428 = vmatprep.subr.mxu0 0.0
    %429 = vmatpush2.xpose.msra.mxu0 0.0
    %430 = vmatprep.subr.mxu0 0.0
    %431 = vmatpush2.xpose.msra.mxu0 0.0
    %432 = vmatprep.subr.mxu0 0.0
    %433 = vmatpush2.xpose.msra.mxu0 0.0
    %434 = vmatprep.subr.mxu0 0.0
    %435 = vmatpush2.xpose.msra.mxu0 0.0
    %436 = vmatprep.subr.mxu0 0.0
    %437 = vmatpush2.xpose.msra.mxu0 0.0
    %438 = vmatprep.subr.mxu0 0.0
    %439 = vmatpush2.xpose.msra.mxu0 0.0
    %440 = vmatprep.subr.mxu0 0.0
    %441 = vmatpush2.xpose.msra.mxu0 0.0
    %442 = vmatprep.subr.mxu0 0.0
    %443 = vmatpush2.xpose.msra.mxu0 0.0
    %444 = vmatprep.subr.mxu0 0.0
    %445 = vmatpush2.xpose.msra.mxu0 0.0
    %446 = vmatprep.subr.mxu0 0.0
    %447 = vmatpush2.xpose.msra.mxu0 0.0
    %448 = vmatprep.subr.mxu0 0.0
    %449 = vmatpush2.xpose.msra.mxu0 0.0
    %450 = vmatprep.subr.mxu0 0.0
    %451 = vmatpush2.xpose.msra.mxu0 0.0
    %452 = vmatprep.subr.mxu0 0.0
    %453 = vmatpush2.xpose.msra.mxu0 0.0
    %454 = vmatprep.subr.mxu0 0.0
    %455 = vmatpush2.xpose.msra.mxu0 0.0
    %456 = vmatprep.subr.mxu0 0.0
    %457 = vmatpush2.xpose.msra.mxu0 0.0
    %458 = vmatprep.subr.mxu0 0.0
    %459 = vmatpush2.xpose.msra.mxu0 0.0
    %460 = vmatprep.mubr.f32.mxu0 0.0
    %461 = vmatmul.mubr.f32.gmra.mxu0 %v388
    %v462 = vpop.f32.mrf.mxu0
    %v463 = vadd.f32 0.0, %v462
    %v464 = vpop.f32.mrf.mxu0
    %465 = vmatprep.mubr.f32.mxu0 0.0
    %466 = vmatmul.mubr.f32.gmra.mxu0 %v390
    %v467 = vpop.f32.mrf.mxu0
    %v468 = vadd.f32 0.0, %v467
    %v469 = vpop.f32.mrf.mxu0
    %470 = vdwg.mxu0
    %v471 = vsel %vm264, %v463, -inf
    %472 = vmax.xlane.f32.xlu0 %v471
    %v473 = vpop.xlane.xlu0 %472
    %v474 = vsel %vm268, %v468, -inf
    %475 = vmax.xlane.f32.xlu0 %v474
    %v476 = vpop.xlane.xlu0 %475
    %v477 = vsub.f32 %v463, %v473
    %v478 = vsub.f32 %v468, %v476
    %v479 = vmul.f32 %v477, 1.442695
    %v480 = vpow.pop %v479
    %v481 = vmul.f32 %v478, 1.442695
    %v482 = vpow.pop %v481
    %v483 = vsel %vm264, %v480, 0.0
    %484 = vadd.xlane.f32.xlu0 %v483
    %v485 = vpop.xlane.xlu0 %484
    %v486 = vsel %vm268, %v482, 0.0
    %487 = vadd.xlane.f32.xlu0 %v486
    %v488 = vpop.xlane.xlu0 %487
    %v489 = vrcp.pop %v485
    %v490 = vrcp.pop %v488
    %v491 = vmul.f32 %v480, %v489
    %v492 = vmul.f32 %v482, %v490
    %493 = vrot.lane.b32.xlu0 %v161, 56
    %v494 = vpop.permute.xlu0 %493
    %495 = vrot.lane.b32.xlu0 %v166, 56
    %v496 = vpop.permute.xlu0 %495
    %v499 = vsel %vm264, %v491, 0
    %v502 = vsel %vm264, %v492, 0
    %v504 = vsel %vm299, %v496, 0
    %506 = vmatprep.subr.mxu0 0.0
    %507 = vmatpush1.msra.mxu0 0.0
    %508 = vmatprep.subr.mxu0 0.0
    %509 = vmatpush1.msra.mxu0 0.0
    %510 = vmatprep.subr.mxu0 0.0
    %511 = vmatpush1.msra.mxu0 0.0
    %512 = vmatprep.subr.mxu0 0.0
    %513 = vmatpush1.msra.mxu0 0.0
    %514 = vmatprep.subr.mxu0 0.0
    %515 = vmatpush1.msra.mxu0 0.0
    %516 = vmatprep.subr.mxu0 0.0
    %517 = vmatpush1.msra.mxu0 0.0
    %518 = vmatprep.subr.mxu0 0.0
    %519 = vmatpush1.msra.mxu0 0.0
    %520 = vmatprep.subr.mxu0 0.0
    %521 = vmatpush1.msra.mxu0 0.0
    %522 = vmatprep.subr.mxu0 0.0
    %523 = vmatpush1.msra.mxu0 0.0
    %524 = vmatprep.subr.mxu0 0.0
    %525 = vmatpush1.msra.mxu0 0.0
    %526 = vmatprep.subr.mxu0 0.0
    %527 = vmatpush1.msra.mxu0 0.0
    %528 = vmatprep.subr.mxu0 0.0
    %529 = vmatpush1.msra.mxu0 0.0
    %530 = vmatprep.subr.mxu0 0.0
    %531 = vmatpush1.msra.mxu0 0.0
    %532 = vmatprep.subr.mxu0 0.0
    %533 = vmatpush1.msra.mxu0 0.0
    %534 = vmatprep.subr.mxu0 0.0
    %535 = vmatpush1.msra.mxu0 %v504
    %536 = vmatprep.subr.mxu0 0.0
    %537 = vmatpush1.msra.mxu0 %v494
    %538 = vmatprep.subr.mxu0 0.0
    %539 = vmatpush2.msra.mxu0 0.0
    %540 = vmatprep.subr.mxu0 0.0
    %541 = vmatpush2.msra.mxu0 0.0
    %542 = vmatprep.subr.mxu0 0.0
    %543 = vmatpush2.msra.mxu0 0.0
    %544 = vmatprep.subr.mxu0 0.0
    %545 = vmatpush2.msra.mxu0 0.0
    %546 = vmatprep.subr.mxu0 0.0
    %547 = vmatpush2.msra.mxu0 0.0
    %548 = vmatprep.subr.mxu0 0.0
    %549 = vmatpush2.msra.mxu0 0.0
    %550 = vmatprep.subr.mxu0 0.0
    %551 = vmatpush2.msra.mxu0 0.0
    %552 = vmatprep.subr.mxu0 0.0
    %553 = vmatpush2.msra.mxu0 0.0
    %554 = vmatprep.subr.mxu0 0.0
    %555 = vmatpush2.msra.mxu0 0.0
    %556 = vmatprep.subr.mxu0 0.0
    %557 = vmatpush2.msra.mxu0 0.0
    %558 = vmatprep.subr.mxu0 0.0
    %559 = vmatpush2.msra.mxu0 0.0
    %560 = vmatprep.subr.mxu0 0.0
    %561 = vmatpush2.msra.mxu0 0.0
    %562 = vmatprep.subr.mxu0 0.0
    %563 = vmatpush2.msra.mxu0 0.0
    %564 = vmatprep.subr.mxu0 0.0
    %565 = vmatpush2.msra.mxu0 0.0
    %566 = vmatprep.subr.mxu0 0.0
    %567 = vmatpush2.msra.mxu0 0.0
    %568 = vmatprep.subr.mxu0 0.0
    %569 = vmatpush2.msra.mxu0 0.0
    %570 = vmatprep.mubr.f32.mxu0 0.0
    %571 = vmatmul.mubr.f32.gmra.mxu0 %v499
    %v572 = vpop.f32.mrf.mxu0
    %v573 = vadd.f32 0.0, %v572
    %v574 = vpop.f32.mrf.mxu0
    %575 = vmatprep.mubr.f32.mxu0 0.0
    %576 = vmatmul.mubr.f32.gmra.mxu0 %v502
    %v577 = vpop.f32.mrf.mxu0
    %v578 = vadd.f32 0.0, %v577
    %v579 = vpop.f32.mrf.mxu0
    %580 = vdwg.mxu0
    %583 = vrot.lane.b32.xlu0 %v573, 8
    %v584 = vpop.permute.xlu0 %583
    %585 = vrot.lane.b32.xlu0 %v578, 8
    %v586 = vpop.permute.xlu0 %585
    %vm589 = vcmask 130112
    %590 = vst.msk [vmem:[#allocation2] sm:$0xff] %vm589, %v584
    %vm591 = vcmask 123968
    %592 = vst.msk [vmem:[#allocation2 + $0x8] sm:$0x3] %vm591, %v586
    %593 = vrot.lane.b32.xlu0 %v161, 112
    %v594 = vpop.permute.xlu0 %593
    %595 = vrot.lane.b32.xlu0 %v166, 112
    %v596 = vpop.permute.xlu0 %595
    %597 = vrot.lane.b32.xlu0 %v161, 80
    %v598 = vpop.permute.xlu0 %597
    %599 = vrot.lane.b32.xlu0 %v166, 80
    %v600 = vpop.permute.xlu0 %599
    %v601 = vsel %vm180, %v594, 0
    %v603 = vsel %vm180, %v596, 0
    %v605 = vsel %vm180, %v598, 0
    %v607 = vsel %vm180, %v600, 0
    %609 = vmatprep.subr.mxu0 0.0
    %610 = vmatpush1.xpose.msra.mxu0 0.0
    %611 = vmatprep.subr.mxu0 0.0
    %612 = vmatpush1.xpose.msra.mxu0 0.0
    %613 = vmatprep.subr.mxu0 0.0
    %614 = vmatpush1.xpose.msra.mxu0 0.0
    %615 = vmatprep.subr.mxu0 0.0
    %616 = vmatpush1.xpose.msra.mxu0 0.0
    %617 = vmatprep.subr.mxu0 0.0
    %618 = vmatpush1.xpose.msra.mxu0 0.0
    %619 = vmatprep.subr.mxu0 0.0
    %620 = vmatpush1.xpose.msra.mxu0 0.0
    %621 = vmatprep.subr.mxu0 0.0
    %622 = vmatpush1.xpose.msra.mxu0 0.0
    %623 = vmatprep.subr.mxu0 0.0
    %624 = vmatpush1.xpose.msra.mxu0 0.0
    %625 = vmatprep.subr.mxu0 0.0
    %626 = vmatpush1.xpose.msra.mxu0 0.0
    %627 = vmatprep.subr.mxu0 0.0
    %628 = vmatpush1.xpose.msra.mxu0 0.0
    %629 = vmatprep.subr.mxu0 0.0
    %630 = vmatpush1.xpose.msra.mxu0 0.0
    %631 = vmatprep.subr.mxu0 0.0
    %632 = vmatpush1.xpose.msra.mxu0 0.0
    %633 = vmatprep.subr.mxu0 0.0
    %634 = vmatpush1.xpose.msra.mxu0 0.0
    %635 = vmatprep.subr.mxu0 0.0
    %636 = vmatpush1.xpose.msra.mxu0 0.0
    %637 = vmatprep.subr.mxu0 0.0
    %638 = vmatpush1.xpose.msra.mxu0 %v607
    %639 = vmatprep.subr.mxu0 0.0
    %640 = vmatpush1.xpose.msra.mxu0 %v605
    %641 = vmatprep.subr.mxu0 0.0
    %642 = vmatpush2.xpose.msra.mxu0 0.0
    %643 = vmatprep.subr.mxu0 0.0
    %644 = vmatpush2.xpose.msra.mxu0 0.0
    %645 = vmatprep.subr.mxu0 0.0
    %646 = vmatpush2.xpose.msra.mxu0 0.0
    %647 = vmatprep.subr.mxu0 0.0
    %648 = vmatpush2.xpose.msra.mxu0 0.0
    %649 = vmatprep.subr.mxu0 0.0
    %650 = vmatpush2.xpose.msra.mxu0 0.0
    %651 = vmatprep.subr.mxu0 0.0
    %652 = vmatpush2.xpose.msra.mxu0 0.0
    %653 = vmatprep.subr.mxu0 0.0
    %654 = vmatpush2.xpose.msra.mxu0 0.0
    %655 = vmatprep.subr.mxu0 0.0
    %656 = vmatpush2.xpose.msra.mxu0 0.0
    %657 = vmatprep.subr.mxu0 0.0
    %658 = vmatpush2.xpose.msra.mxu0 0.0
    %659 = vmatprep.subr.mxu0 0.0
    %660 = vmatpush2.xpose.msra.mxu0 0.0
    %661 = vmatprep.subr.mxu0 0.0
    %662 = vmatpush2.xpose.msra.mxu0 0.0
    %663 = vmatprep.subr.mxu0 0.0
    %664 = vmatpush2.xpose.msra.mxu0 0.0
    %665 = vmatprep.subr.mxu0 0.0
    %666 = vmatpush2.xpose.msra.mxu0 0.0
    %667 = vmatprep.subr.mxu0 0.0
    %668 = vmatpush2.xpose.msra.mxu0 0.0
    %669 = vmatprep.subr.mxu0 0.0
    %670 = vmatpush2.xpose.msra.mxu0 0.0
    %671 = vmatprep.subr.mxu0 0.0
    %672 = vmatpush2.xpose.msra.mxu0 0.0
    %673 = vmatprep.mubr.f32.mxu0 0.0
    %674 = vmatmul.mubr.f32.gmra.mxu0 %v601
    %v675 = vpop.f32.mrf.mxu0
    %v676 = vadd.f32 0.0, %v675
    %v677 = vpop.f32.mrf.mxu0
    %678 = vmatprep.mubr.f32.mxu0 0.0
    %679 = vmatmul.mubr.f32.gmra.mxu0 %v603
    %v680 = vpop.f32.mrf.mxu0
    %v681 = vadd.f32 0.0, %v680
    %v682 = vpop.f32.mrf.mxu0
    %683 = vdwg.mxu0
    %v684 = vsel %vm264, %v676, -inf
    %685 = vmax.xlane.f32.xlu0 %v684
    %v686 = vpop.xlane.xlu0 %685
    %v687 = vsel %vm268, %v681, -inf
    %688 = vmax.xlane.f32.xlu0 %v687
    %v689 = vpop.xlane.xlu0 %688
    %v690 = vsub.f32 %v676, %v686
    %v691 = vsub.f32 %v681, %v689
    %v692 = vmul.f32 %v690, 1.442695
    %v693 = vpow.pop %v692
    %v694 = vmul.f32 %v691, 1.442695
    %v695 = vpow.pop %v694
    %v696 = vsel %vm264, %v693, 0.0
    %697 = vadd.xlane.f32.xlu0 %v696
    %v698 = vpop.xlane.xlu0 %697
    %v699 = vsel %vm268, %v695, 0.0
    %700 = vadd.xlane.f32.xlu0 %v699
    %v701 = vpop.xlane.xlu0 %700
    %v702 = vrcp.pop %v698
    %v703 = vrcp.pop %v701
    %v704 = vmul.f32 %v693, %v702
    %v705 = vmul.f32 %v695, %v703
    %706 = vrot.lane.b32.xlu0 %v161, 48
    %v707 = vpop.permute.xlu0 %706
    %708 = vrot.lane.b32.xlu0 %v166, 48
    %v709 = vpop.permute.xlu0 %708
    %v712 = vsel %vm264, %v704, 0
    %v715 = vsel %vm264, %v705, 0
    %v717 = vsel %vm299, %v709, 0
    %719 = vmatprep.subr.mxu0 0.0
    %720 = vmatpush1.msra.mxu0 0.0
    %721 = vmatprep.subr.mxu0 0.0
    %722 = vmatpush1.msra.mxu0 0.0
    %723 = vmatprep.subr.mxu0 0.0
    %724 = vmatpush1.msra.mxu0 0.0
    %725 = vmatprep.subr.mxu0 0.0
    %726 = vmatpush1.msra.mxu0 0.0
    %727 = vmatprep.subr.mxu0 0.0
    %728 = vmatpush1.msra.mxu0 0.0
    %729 = vmatprep.subr.mxu0 0.0
    %730 = vmatpush1.msra.mxu0 0.0
    %731 = vmatprep.subr.mxu0 0.0
    %732 = vmatpush1.msra.mxu0 0.0
    %733 = vmatprep.subr.mxu0 0.0
    %734 = vmatpush1.msra.mxu0 0.0
    %735 = vmatprep.subr.mxu0 0.0
    %736 = vmatpush1.msra.mxu0 0.0
    %737 = vmatprep.subr.mxu0 0.0
    %738 = vmatpush1.msra.mxu0 0.0
    %739 = vmatprep.subr.mxu0 0.0
    %740 = vmatpush1.msra.mxu0 0.0
    %741 = vmatprep.subr.mxu0 0.0
    %742 = vmatpush1.msra.mxu0 0.0
    %743 = vmatprep.subr.mxu0 0.0
    %744 = vmatpush1.msra.mxu0 0.0
    %745 = vmatprep.subr.mxu0 0.0
    %746 = vmatpush1.msra.mxu0 0.0
    %747 = vmatprep.subr.mxu0 0.0
    %748 = vmatpush1.msra.mxu0 %v717
    %749 = vmatprep.subr.mxu0 0.0
    %750 = vmatpush1.msra.mxu0 %v707
    %751 = vmatprep.subr.mxu0 0.0
    %752 = vmatpush2.msra.mxu0 0.0
    %753 = vmatprep.subr.mxu0 0.0
    %754 = vmatpush2.msra.mxu0 0.0
    %755 = vmatprep.subr.mxu0 0.0
    %756 = vmatpush2.msra.mxu0 0.0
    %757 = vmatprep.subr.mxu0 0.0
    %758 = vmatpush2.msra.mxu0 0.0
    %759 = vmatprep.subr.mxu0 0.0
    %760 = vmatpush2.msra.mxu0 0.0
    %761 = vmatprep.subr.mxu0 0.0
    %762 = vmatpush2.msra.mxu0 0.0
    %763 = vmatprep.subr.mxu0 0.0
    %764 = vmatpush2.msra.mxu0 0.0
    %765 = vmatprep.subr.mxu0 0.0
    %766 = vmatpush2.msra.mxu0 0.0
    %767 = vmatprep.subr.mxu0 0.0
    %768 = vmatpush2.msra.mxu0 0.0
    %769 = vmatprep.subr.mxu0 0.0
    %770 = vmatpush2.msra.mxu0 0.0
    %771 = vmatprep.subr.mxu0 0.0
    %772 = vmatpush2.msra.mxu0 0.0
    %773 = vmatprep.subr.mxu0 0.0
    %774 = vmatpush2.msra.mxu0 0.0
    %775 = vmatprep.subr.mxu0 0.0
    %776 = vmatpush2.msra.mxu0 0.0
    %777 = vmatprep.subr.mxu0 0.0
    %778 = vmatpush2.msra.mxu0 0.0
    %779 = vmatprep.subr.mxu0 0.0
    %780 = vmatpush2.msra.mxu0 0.0
    %781 = vmatprep.subr.mxu0 0.0
    %782 = vmatpush2.msra.mxu0 0.0
    %783 = vmatprep.mubr.f32.mxu0 0.0
    %784 = vmatmul.mubr.f32.gmra.mxu0 %v712
    %v785 = vpop.f32.mrf.mxu0
    %v786 = vadd.f32 0.0, %v785
    %v787 = vpop.f32.mrf.mxu0
    %788 = vmatprep.mubr.f32.mxu0 0.0
    %789 = vmatmul.mubr.f32.gmra.mxu0 %v715
    %v790 = vpop.f32.mrf.mxu0
    %v791 = vadd.f32 0.0, %v790
    %v792 = vpop.f32.mrf.mxu0
    %793 = vdwg.mxu0
    %796 = vrot.lane.b32.xlu0 %v786, 16
    %v797 = vpop.permute.xlu0 %796
    %798 = vrot.lane.b32.xlu0 %v791, 16
    %v799 = vpop.permute.xlu0 %798
    %vm802 = vcmask 195712
    %803 = vst.msk [vmem:[#allocation2] sm:$0xff] %vm802, %v797
    %vm804 = vcmask 189568
    %805 = vst.msk [vmem:[#allocation2 + $0x8] sm:$0x3] %vm804, %v799
    %806 = vrot.lane.b32.xlu0 %v161, 104
    %v807 = vpop.permute.xlu0 %806
    %808 = vrot.lane.b32.xlu0 %v166, 104
    %v809 = vpop.permute.xlu0 %808
    %810 = vrot.lane.b32.xlu0 %v161, 72
    %v811 = vpop.permute.xlu0 %810
    %812 = vrot.lane.b32.xlu0 %v166, 72
    %v813 = vpop.permute.xlu0 %812
    %v814 = vsel %vm180, %v807, 0
    %v816 = vsel %vm180, %v809, 0
    %v818 = vsel %vm180, %v811, 0
    %v820 = vsel %vm180, %v813, 0
    %822 = vmatprep.subr.mxu0 0.0
    %823 = vmatpush1.xpose.msra.mxu0 0.0
    %824 = vmatprep.subr.mxu0 0.0
    %825 = vmatpush1.xpose.msra.mxu0 0.0
    %826 = vmatprep.subr.mxu0 0.0
    %827 = vmatpush1.xpose.msra.mxu0 0.0
    %828 = vmatprep.subr.mxu0 0.0
    %829 = vmatpush1.xpose.msra.mxu0 0.0
    %830 = vmatprep.subr.mxu0 0.0
    %831 = vmatpush1.xpose.msra.mxu0 0.0
    %832 = vmatprep.subr.mxu0 0.0
    %833 = vmatpush1.xpose.msra.mxu0 0.0
    %834 = vmatprep.subr.mxu0 0.0
    %835 = vmatpush1.xpose.msra.mxu0 0.0
    %836 = vmatprep.subr.mxu0 0.0
    %837 = vmatpush1.xpose.msra.mxu0 0.0
    %838 = vmatprep.subr.mxu0 0.0
    %839 = vmatpush1.xpose.msra.mxu0 0.0
    %840 = vmatprep.subr.mxu0 0.0
    %841 = vmatpush1.xpose.msra.mxu0 0.0
    %842 = vmatprep.subr.mxu0 0.0
    %843 = vmatpush1.xpose.msra.mxu0 0.0
    %844 = vmatprep.subr.mxu0 0.0
    %845 = vmatpush1.xpose.msra.mxu0 0.0
    %846 = vmatprep.subr.mxu0 0.0
    %847 = vmatpush1.xpose.msra.mxu0 0.0
    %848 = vmatprep.subr.mxu0 0.0
    %849 = vmatpush1.xpose.msra.mxu0 0.0
    %850 = vmatprep.subr.mxu0 0.0
    %851 = vmatpush1.xpose.msra.mxu0 %v820
    %852 = vmatprep.subr.mxu0 0.0
    %853 = vmatpush1.xpose.msra.mxu0 %v818
    %854 = vmatprep.subr.mxu0 0.0
    %855 = vmatpush2.xpose.msra.mxu0 0.0
    %856 = vmatprep.subr.mxu0 0.0
    %857 = vmatpush2.xpose.msra.mxu0 0.0
    %858 = vmatprep.subr.mxu0 0.0
    %859 = vmatpush2.xpose.msra.mxu0 0.0
    %860 = vmatprep.subr.mxu0 0.0
    %861 = vmatpush2.xpose.msra.mxu0 0.0
    %862 = vmatprep.subr.mxu0 0.0
    %863 = vmatpush2.xpose.msra.mxu0 0.0
    %864 = vmatprep.subr.mxu0 0.0
    %865 = vmatpush2.xpose.msra.mxu0 0.0
    %866 = vmatprep.subr.mxu0 0.0
    %867 = vmatpush2.xpose.msra.mxu0 0.0
    %868 = vmatprep.subr.mxu0 0.0
    %869 = vmatpush2.xpose.msra.mxu0 0.0
    %870 = vmatprep.subr.mxu0 0.0
    %871 = vmatpush2.xpose.msra.mxu0 0.0
    %872 = vmatprep.subr.mxu0 0.0
    %873 = vmatpush2.xpose.msra.mxu0 0.0
    %874 = vmatprep.subr.mxu0 0.0
    %875 = vmatpush2.xpose.msra.mxu0 0.0
    %876 = vmatprep.subr.mxu0 0.0
    %877 = vmatpush2.xpose.msra.mxu0 0.0
    %878 = vmatprep.subr.mxu0 0.0
    %879 = vmatpush2.xpose.msra.mxu0 0.0
    %880 = vmatprep.subr.mxu0 0.0
    %881 = vmatpush2.xpose.msra.mxu0 0.0
    %882 = vmatprep.subr.mxu0 0.0
    %883 = vmatpush2.xpose.msra.mxu0 0.0
    %884 = vmatprep.subr.mxu0 0.0
    %885 = vmatpush2.xpose.msra.mxu0 0.0
    %886 = vmatprep.mubr.f32.mxu0 0.0
    %887 = vmatmul.mubr.f32.gmra.mxu0 %v814
    %v888 = vpop.f32.mrf.mxu0
    %v889 = vadd.f32 0.0, %v888
    %v890 = vpop.f32.mrf.mxu0
    %891 = vmatprep.mubr.f32.mxu0 0.0
    %892 = vmatmul.mubr.f32.gmra.mxu0 %v816
    %v893 = vpop.f32.mrf.mxu0
    %v894 = vadd.f32 0.0, %v893
    %v895 = vpop.f32.mrf.mxu0
    %896 = vdwg.mxu0
    %v897 = vsel %vm264, %v889, -inf
    %898 = vmax.xlane.f32.xlu0 %v897
    %v899 = vpop.xlane.xlu0 %898
    %v900 = vsel %vm268, %v894, -inf
    %901 = vmax.xlane.f32.xlu0 %v900
    %v902 = vpop.xlane.xlu0 %901
    %v903 = vsub.f32 %v889, %v899
    %v904 = vsub.f32 %v894, %v902
    %v905 = vmul.f32 %v903, 1.442695
    %v906 = vpow.pop %v905
    %v907 = vmul.f32 %v904, 1.442695
    %v908 = vpow.pop %v907
    %v909 = vsel %vm264, %v906, 0.0
    %910 = vadd.xlane.f32.xlu0 %v909
    %v911 = vpop.xlane.xlu0 %910
    %v912 = vsel %vm268, %v908, 0.0
    %913 = vadd.xlane.f32.xlu0 %v912
    %v914 = vpop.xlane.xlu0 %913
    %v915 = vrcp.pop %v911
    %v916 = vrcp.pop %v914
    %v917 = vmul.f32 %v906, %v915
    %v918 = vmul.f32 %v908, %v916
    %919 = vrot.lane.b32.xlu0 %v161, 40
    %v920 = vpop.permute.xlu0 %919
    %921 = vrot.lane.b32.xlu0 %v166, 40
    %v922 = vpop.permute.xlu0 %921
    %v925 = vsel %vm264, %v917, 0
    %v928 = vsel %vm264, %v918, 0
    %v930 = vsel %vm299, %v922, 0
    %932 = vmatprep.subr.mxu0 0.0
    %933 = vmatpush1.msra.mxu0 0.0
    %934 = vmatprep.subr.mxu0 0.0
    %935 = vmatpush1.msra.mxu0 0.0
    %936 = vmatprep.subr.mxu0 0.0
    %937 = vmatpush1.msra.mxu0 0.0
    %938 = vmatprep.subr.mxu0 0.0
    %939 = vmatpush1.msra.mxu0 0.0
    %940 = vmatprep.subr.mxu0 0.0
    %941 = vmatpush1.msra.mxu0 0.0
    %942 = vmatprep.subr.mxu0 0.0
    %943 = vmatpush1.msra.mxu0 0.0
    %944 = vmatprep.subr.mxu0 0.0
    %945 = vmatpush1.msra.mxu0 0.0
    %946 = vmatprep.subr.mxu0 0.0
    %947 = vmatpush1.msra.mxu0 0.0
    %948 = vmatprep.subr.mxu0 0.0
    %949 = vmatpush1.msra.mxu0 0.0
    %950 = vmatprep.subr.mxu0 0.0
    %951 = vmatpush1.msra.mxu0 0.0
    %952 = vmatprep.subr.mxu0 0.0
    %953 = vmatpush1.msra.mxu0 0.0
    %954 = vmatprep.subr.mxu0 0.0
    %955 = vmatpush1.msra.mxu0 0.0
    %956 = vmatprep.subr.mxu0 0.0
    %957 = vmatpush1.msra.mxu0 0.0
    %958 = vmatprep.subr.mxu0 0.0
    %959 = vmatpush1.msra.mxu0 0.0
    %960 = vmatprep.subr.mxu0 0.0
    %961 = vmatpush1.msra.mxu0 %v930
    %962 = vmatprep.subr.mxu0 0.0
    %963 = vmatpush1.msra.mxu0 %v920
    %964 = vmatprep.subr.mxu0 0.0
    %965 = vmatpush2.msra.mxu0 0.0
    %966 = vmatprep.subr.mxu0 0.0
    %967 = vmatpush2.msra.mxu0 0.0
    %968 = vmatprep.subr.mxu0 0.0
    %969 = vmatpush2.msra.mxu0 0.0
    %970 = vmatprep.subr.mxu0 0.0
    %971 = vmatpush2.msra.mxu0 0.0
    %972 = vmatprep.subr.mxu0 0.0
    %973 = vmatpush2.msra.mxu0 0.0
    %974 = vmatprep.subr.mxu0 0.0
    %975 = vmatpush2.msra.mxu0 0.0
    %976 = vmatprep.subr.mxu0 0.0
    %977 = vmatpush2.msra.mxu0 0.0
    %978 = vmatprep.subr.mxu0 0.0
    %979 = vmatpush2.msra.mxu0 0.0
    %980 = vmatprep.subr.mxu0 0.0
    %981 = vmatpush2.msra.mxu0 0.0
    %982 = vmatprep.subr.mxu0 0.0
    %983 = vmatpush2.msra.mxu0 0.0
    %984 = vmatprep.subr.mxu0 0.0
    %985 = vmatpush2.msra.mxu0 0.0
    %986 = vmatprep.subr.mxu0 0.0
    %987 = vmatpush2.msra.mxu0 0.0
    %988 = vmatprep.subr.mxu0 0.0
    %989 = vmatpush2.msra.mxu0 0.0
    %990 = vmatprep.subr.mxu0 0.0
    %991 = vmatpush2.msra.mxu0 0.0
    %992 = vmatprep.subr.mxu0 0.0
    %993 = vmatpush2.msra.mxu0 0.0
    %994 = vmatprep.subr.mxu0 0.0
    %995 = vmatpush2.msra.mxu0 0.0
    %996 = vmatprep.mubr.f32.mxu0 0.0
    %997 = vmatmul.mubr.f32.gmra.mxu0 %v925
    %v998 = vpop.f32.mrf.mxu0
    %v999 = vadd.f32 0.0, %v998
    %v1000 = vpop.f32.mrf.mxu0
    %1001 = vmatprep.mubr.f32.mxu0 0.0
    %1002 = vmatmul.mubr.f32.gmra.mxu0 %v928
    %v1003 = vpop.f32.mrf.mxu0
    %v1004 = vadd.f32 0.0, %v1003
    %v1005 = vpop.f32.mrf.mxu0
    %1006 = vdwg.mxu0
    %1009 = vrot.lane.b32.xlu0 %v999, 24
    %v1010 = vpop.permute.xlu0 %1009
    %1011 = vrot.lane.b32.xlu0 %v1004, 24
    %v1012 = vpop.permute.xlu0 %1011
    %vm1015 = vcmask 261312
    %1016 = vst.msk [vmem:[#allocation2] sm:$0xff] %vm1015, %v1010
    %vm1017 = vcmask 255168
    %1018 = vst.msk [vmem:[#allocation2 + $0x8] sm:$0x3] %vm1017, %v1012
    %vm1020 = vcmask 1045504
    %v1021 = vrot.slane %v166, 2
    %v1022 = vrot.slane %v171, 2
    %v1023 = vsel %vm1020, %v1021, %v1022
    %1024 = vrot.lane.b32.xlu0 %v1023, 96
    %v1025 = vpop.permute.xlu0 %1024
    %1026 = vrot.lane.b32.xlu0 %v1022, 96
    %v1027 = vpop.permute.xlu0 %1026
    %v1028 = vsel %vm180, %v1023, 0
    %v1030 = vsel %vm180, %v1022, 0
    %v1032 = vsel %vm180, %v1025, 0
    %v1034 = vsel %vm180, %v1027, 0
    %1036 = vmatprep.subr.mxu0 0.0
    %1037 = vmatpush1.xpose.msra.mxu0 0.0
    %1038 = vmatprep.subr.mxu0 0.0
    %1039 = vmatpush1.xpose.msra.mxu0 0.0
    %1040 = vmatprep.subr.mxu0 0.0
    %1041 = vmatpush1.xpose.msra.mxu0 0.0
    %1042 = vmatprep.subr.mxu0 0.0
    %1043 = vmatpush1.xpose.msra.mxu0 0.0
    %1044 = vmatprep.subr.mxu0 0.0
    %1045 = vmatpush1.xpose.msra.mxu0 0.0
    %1046 = vmatprep.subr.mxu0 0.0
    %1047 = vmatpush1.xpose.msra.mxu0 0.0
    %1048 = vmatprep.subr.mxu0 0.0
    %1049 = vmatpush1.xpose.msra.mxu0 0.0
    %1050 = vmatprep.subr.mxu0 0.0
    %1051 = vmatpush1.xpose.msra.mxu0 0.0
    %1052 = vmatprep.subr.mxu0 0.0
    %1053 = vmatpush1.xpose.msra.mxu0 0.0
    %1054 = vmatprep.subr.mxu0 0.0
    %1055 = vmatpush1.xpose.msra.mxu0 0.0
    %1056 = vmatprep.subr.mxu0 0.0
    %1057 = vmatpush1.xpose.msra.mxu0 0.0
    %1058 = vmatprep.subr.mxu0 0.0
    %1059 = vmatpush1.xpose.msra.mxu0 0.0
    %1060 = vmatprep.subr.mxu0 0.0
    %1061 = vmatpush1.xpose.msra.mxu0 0.0
    %1062 = vmatprep.subr.mxu0 0.0
    %1063 = vmatpush1.xpose.msra.mxu0 0.0
    %1064 = vmatprep.subr.mxu0 0.0
    %1065 = vmatpush1.xpose.msra.mxu0 %v1034
    %1066 = vmatprep.subr.mxu0 0.0
    %1067 = vmatpush1.xpose.msra.mxu0 %v1032
    %1068 = vmatprep.subr.mxu0 0.0
    %1069 = vmatpush2.xpose.msra.mxu0 0.0
    %1070 = vmatprep.subr.mxu0 0.0
    %1071 = vmatpush2.xpose.msra.mxu0 0.0
    %1072 = vmatprep.subr.mxu0 0.0
    %1073 = vmatpush2.xpose.msra.mxu0 0.0
    %1074 = vmatprep.subr.mxu0 0.0
    %1075 = vmatpush2.xpose.msra.mxu0 0.0
    %1076 = vmatprep.subr.mxu0 0.0
    %1077 = vmatpush2.xpose.msra.mxu0 0.0
    %1078 = vmatprep.subr.mxu0 0.0
    %1079 = vmatpush2.xpose.msra.mxu0 0.0
    %1080 = vmatprep.subr.mxu0 0.0
    %1081 = vmatpush2.xpose.msra.mxu0 0.0
    %1082 = vmatprep.subr.mxu0 0.0
    %1083 = vmatpush2.xpose.msra.mxu0 0.0
    %1084 = vmatprep.subr.mxu0 0.0
    %1085 = vmatpush2.xpose.msra.mxu0 0.0
    %1086 = vmatprep.subr.mxu0 0.0
    %1087 = vmatpush2.xpose.msra.mxu0 0.0
    %1088 = vmatprep.subr.mxu0 0.0
    %1089 = vmatpush2.xpose.msra.mxu0 0.0
    %1090 = vmatprep.subr.mxu0 0.0
    %1091 = vmatpush2.xpose.msra.mxu0 0.0
    %1092 = vmatprep.subr.mxu0 0.0
    %1093 = vmatpush2.xpose.msra.mxu0 0.0
    %1094 = vmatprep.subr.mxu0 0.0
    %1095 = vmatpush2.xpose.msra.mxu0 0.0
    %1096 = vmatprep.subr.mxu0 0.0
    %1097 = vmatpush2.xpose.msra.mxu0 0.0
    %1098 = vmatprep.subr.mxu0 0.0
    %1099 = vmatpush2.xpose.msra.mxu0 0.0
    %1100 = vmatprep.mubr.f32.mxu0 0.0
    %1101 = vmatmul.mubr.f32.gmra.mxu0 %v1028
    %v1102 = vpop.f32.mrf.mxu0
    %v1103 = vadd.f32 0.0, %v1102
    %v1104 = vpop.f32.mrf.mxu0
    %1105 = vmatprep.mubr.f32.mxu0 0.0
    %1106 = vmatmul.mubr.f32.gmra.mxu0 %v1030
    %v1107 = vpop.f32.mrf.mxu0
    %v1108 = vadd.f32 0.0, %v1107
    %v1109 = vpop.f32.mrf.mxu0
    %1110 = vdwg.mxu0
    %v1111 = vsel %vm264, %v1103, -inf
    %1112 = vmax.xlane.f32.xlu0 %v1111
    %v1113 = vpop.xlane.xlu0 %1112
    %v1114 = vsel %vm268, %v1108, -inf
    %1115 = vmax.xlane.f32.xlu0 %v1114
    %v1116 = vpop.xlane.xlu0 %1115
    %v1117 = vsub.f32 %v1103, %v1113
    %v1118 = vsub.f32 %v1108, %v1116
    %v1119 = vmul.f32 %v1117, 1.442695
    %v1120 = vpow.pop %v1119
    %v1121 = vmul.f32 %v1118, 1.442695
    %v1122 = vpow.pop %v1121
    %v1123 = vsel %vm264, %v1120, 0.0
    %1124 = vadd.xlane.f32.xlu0 %v1123
    %v1125 = vpop.xlane.xlu0 %1124
    %v1126 = vsel %vm268, %v1122, 0.0
    %1127 = vadd.xlane.f32.xlu0 %v1126
    %v1128 = vpop.xlane.xlu0 %1127
    %v1129 = vrcp.pop %v1125
    %v1130 = vrcp.pop %v1128
    %v1131 = vmul.f32 %v1120, %v1129
    %v1132 = vmul.f32 %v1122, %v1130
    %1133 = vrot.lane.b32.xlu0 %v1023, 64
    %v1134 = vpop.permute.xlu0 %1133
    %1135 = vrot.lane.b32.xlu0 %v1022, 64
    %v1136 = vpop.permute.xlu0 %1135
    %v1139 = vsel %vm264, %v1131, 0
    %v1142 = vsel %vm264, %v1132, 0
    %v1144 = vsel %vm299, %v1136, 0
    %1146 = vmatprep.subr.mxu0 0.0
    %1147 = vmatpush1.msra.mxu0 0.0
    %1148 = vmatprep.subr.mxu0 0.0
    %1149 = vmatpush1.msra.mxu0 0.0
    %1150 = vmatprep.subr.mxu0 0.0
    %1151 = vmatpush1.msra.mxu0 0.0
    %1152 = vmatprep.subr.mxu0 0.0
    %1153 = vmatpush1.msra.mxu0 0.0
    %1154 = vmatprep.subr.mxu0 0.0
    %1155 = vmatpush1.msra.mxu0 0.0
    %1156 = vmatprep.subr.mxu0 0.0
    %1157 = vmatpush1.msra.mxu0 0.0
    %1158 = vmatprep.subr.mxu0 0.0
    %1159 = vmatpush1.msra.mxu0 0.0
    %1160 = vmatprep.subr.mxu0 0.0
    %1161 = vmatpush1.msra.mxu0 0.0
    %1162 = vmatprep.subr.mxu0 0.0
    %1163 = vmatpush1.msra.mxu0 0.0
    %1164 = vmatprep.subr.mxu0 0.0
    %1165 = vmatpush1.msra.mxu0 0.0
    %1166 = vmatprep.subr.mxu0 0.0
    %1167 = vmatpush1.msra.mxu0 0.0
    %1168 = vmatprep.subr.mxu0 0.0
    %1169 = vmatpush1.msra.mxu0 0.0
    %1170 = vmatprep.subr.mxu0 0.0
    %1171 = vmatpush1.msra.mxu0 0.0
    %1172 = vmatprep.subr.mxu0 0.0
    %1173 = vmatpush1.msra.mxu0 0.0
    %1174 = vmatprep.subr.mxu0 0.0
    %1175 = vmatpush1.msra.mxu0 %v1144
    %1176 = vmatprep.subr.mxu0 0.0
    %1177 = vmatpush1.msra.mxu0 %v1134
    %1178 = vmatprep.subr.mxu0 0.0
    %1179 = vmatpush2.msra.mxu0 0.0
    %1180 = vmatprep.subr.mxu0 0.0
    %1181 = vmatpush2.msra.mxu0 0.0
    %1182 = vmatprep.subr.mxu0 0.0
    %1183 = vmatpush2.msra.mxu0 0.0
    %1184 = vmatprep.subr.mxu0 0.0
    %1185 = vmatpush2.msra.mxu0 0.0
    %1186 = vmatprep.subr.mxu0 0.0
    %1187 = vmatpush2.msra.mxu0 0.0
    %1188 = vmatprep.subr.mxu0 0.0
    %1189 = vmatpush2.msra.mxu0 0.0
    %1190 = vmatprep.subr.mxu0 0.0
    %1191 = vmatpush2.msra.mxu0 0.0
    %1192 = vmatprep.subr.mxu0 0.0
    %1193 = vmatpush2.msra.mxu0 0.0
    %1194 = vmatprep.subr.mxu0 0.0
    %1195 = vmatpush2.msra.mxu0 0.0
    %1196 = vmatprep.subr.mxu0 0.0
    %1197 = vmatpush2.msra.mxu0 0.0
    %1198 = vmatprep.subr.mxu0 0.0
    %1199 = vmatpush2.msra.mxu0 0.0
    %1200 = vmatprep.subr.mxu0 0.0
    %1201 = vmatpush2.msra.mxu0 0.0
    %1202 = vmatprep.subr.mxu0 0.0
    %1203 = vmatpush2.msra.mxu0 0.0
    %1204 = vmatprep.subr.mxu0 0.0
    %1205 = vmatpush2.msra.mxu0 0.0
    %1206 = vmatprep.subr.mxu0 0.0
    %1207 = vmatpush2.msra.mxu0 0.0
    %1208 = vmatprep.subr.mxu0 0.0
    %1209 = vmatpush2.msra.mxu0 0.0
    %1210 = vmatprep.mubr.f32.mxu0 0.0
    %1211 = vmatmul.mubr.f32.gmra.mxu0 %v1139
    %v1212 = vpop.f32.mrf.mxu0
    %v1213 = vadd.f32 0.0, %v1212
    %v1214 = vpop.f32.mrf.mxu0
    %1215 = vmatprep.mubr.f32.mxu0 0.0
    %1216 = vmatmul.mubr.f32.gmra.mxu0 %v1142
    %v1217 = vpop.f32.mrf.mxu0
    %v1218 = vadd.f32 0.0, %v1217
    %v1219 = vpop.f32.mrf.mxu0
    %1220 = vdwg.mxu0
    %1221 = vst.msk [vmem:[#allocation2 + $0xa] sm:$0xff] %vm180, %v1213
    %1222 = vst.msk [vmem:[#allocation2 + $0x12] sm:$0x3] %vm378, %v1218
    %1223 = vrot.lane.b32.xlu0 %v1023, 120
    %v1224 = vpop.permute.xlu0 %1223
    %1225 = vrot.lane.b32.xlu0 %v1022, 120
    %v1226 = vpop.permute.xlu0 %1225
    %1227 = vrot.lane.b32.xlu0 %v1023, 88
    %v1228 = vpop.permute.xlu0 %1227
    %1229 = vrot.lane.b32.xlu0 %v1022, 88
    %v1230 = vpop.permute.xlu0 %1229
    %v1231 = vsel %vm180, %v1224, 0
    %v1233 = vsel %vm180, %v1226, 0
    %v1235 = vsel %vm180, %v1228, 0
    %v1237 = vsel %vm180, %v1230, 0
    %1239 = vmatprep.subr.mxu0 0.0
    %1240 = vmatpush1.xpose.msra.mxu0 0.0
    %1241 = vmatprep.subr.mxu0 0.0
    %1242 = vmatpush1.xpose.msra.mxu0 0.0
    %1243 = vmatprep.subr.mxu0 0.0
    %1244 = vmatpush1.xpose.msra.mxu0 0.0
    %1245 = vmatprep.subr.mxu0 0.0
    %1246 = vmatpush1.xpose.msra.mxu0 0.0
    %1247 = vmatprep.subr.mxu0 0.0
    %1248 = vmatpush1.xpose.msra.mxu0 0.0
    %1249 = vmatprep.subr.mxu0 0.0
    %1250 = vmatpush1.xpose.msra.mxu0 0.0
    %1251 = vmatprep.subr.mxu0 0.0
    %1252 = vmatpush1.xpose.msra.mxu0 0.0
    %1253 = vmatprep.subr.mxu0 0.0
    %1254 = vmatpush1.xpose.msra.mxu0 0.0
    %1255 = vmatprep.subr.mxu0 0.0
    %1256 = vmatpush1.xpose.msra.mxu0 0.0
    %1257 = vmatprep.subr.mxu0 0.0
    %1258 = vmatpush1.xpose.msra.mxu0 0.0
    %1259 = vmatprep.subr.mxu0 0.0
    %1260 = vmatpush1.xpose.msra.mxu0 0.0
    %1261 = vmatprep.subr.mxu0 0.0
    %1262 = vmatpush1.xpose.msra.mxu0 0.0
    %1263 = vmatprep.subr.mxu0 0.0
    %1264 = vmatpush1.xpose.msra.mxu0 0.0
    %1265 = vmatprep.subr.mxu0 0.0
    %1266 = vmatpush1.xpose.msra.mxu0 0.0
    %1267 = vmatprep.subr.mxu0 0.0
    %1268 = vmatpush1.xpose.msra.mxu0 %v1237
    %1269 = vmatprep.subr.mxu0 0.0
    %1270 = vmatpush1.xpose.msra.mxu0 %v1235
    %1271 = vmatprep.subr.mxu0 0.0
    %1272 = vmatpush2.xpose.msra.mxu0 0.0
    %1273 = vmatprep.subr.mxu0 0.0
    %1274 = vmatpush2.xpose.msra.mxu0 0.0
    %1275 = vmatprep.subr.mxu0 0.0
    %1276 = vmatpush2.xpose.msra.mxu0 0.0
    %1277 = vmatprep.subr.mxu0 0.0
    %1278 = vmatpush2.xpose.msra.mxu0 0.0
    %1279 = vmatprep.subr.mxu0 0.0
    %1280 = vmatpush2.xpose.msra.mxu0 0.0
    %1281 = vmatprep.subr.mxu0 0.0
    %1282 = vmatpush2.xpose.msra.mxu0 0.0
    %1283 = vmatprep.subr.mxu0 0.0
    %1284 = vmatpush2.xpose.msra.mxu0 0.0
    %1285 = vmatprep.subr.mxu0 0.0
    %1286 = vmatpush2.xpose.msra.mxu0 0.0
    %1287 = vmatprep.subr.mxu0 0.0
    %1288 = vmatpush2.xpose.msra.mxu0 0.0
    %1289 = vmatprep.subr.mxu0 0.0
    %1290 = vmatpush2.xpose.msra.mxu0 0.0
    %1291 = vmatprep.subr.mxu0 0.0
    %1292 = vmatpush2.xpose.msra.mxu0 0.0
    %1293 = vmatprep.subr.mxu0 0.0
    %1294 = vmatpush2.xpose.msra.mxu0 0.0
    %1295 = vmatprep.subr.mxu0 0.0
    %1296 = vmatpush2.xpose.msra.mxu0 0.0
    %1297 = vmatprep.subr.mxu0 0.0
    %1298 = vmatpush2.xpose.msra.mxu0 0.0
    %1299 = vmatprep.subr.mxu0 0.0
    %1300 = vmatpush2.xpose.msra.mxu0 0.0
    %1301 = vmatprep.subr.mxu0 0.0
    %1302 = vmatpush2.xpose.msra.mxu0 0.0
    %1303 = vmatprep.mubr.f32.mxu0 0.0
    %1304 = vmatmul.mubr.f32.gmra.mxu0 %v1231
    %v1305 = vpop.f32.mrf.mxu0
    %v1306 = vadd.f32 0.0, %v1305
    %v1307 = vpop.f32.mrf.mxu0
    %1308 = vmatprep.mubr.f32.mxu0 0.0
    %1309 = vmatmul.mubr.f32.gmra.mxu0 %v1233
    %v1310 = vpop.f32.mrf.mxu0
    %v1311 = vadd.f32 0.0, %v1310
    %v1312 = vpop.f32.mrf.mxu0
    %1313 = vdwg.mxu0
    %v1314 = vsel %vm264, %v1306, -inf
    %1315 = vmax.xlane.f32.xlu0 %v1314
    %v1316 = vpop.xlane.xlu0 %1315
    %v1317 = vsel %vm268, %v1311, -inf
    %1318 = vmax.xlane.f32.xlu0 %v1317
    %v1319 = vpop.xlane.xlu0 %1318
    %v1320 = vsub.f32 %v1306, %v1316
    %v1321 = vsub.f32 %v1311, %v1319
    %v1322 = vmul.f32 %v1320, 1.442695
    %v1323 = vpow.pop %v1322
    %v1324 = vmul.f32 %v1321, 1.442695
    %v1325 = vpow.pop %v1324
    %v1326 = vsel %vm264, %v1323, 0.0
    %1327 = vadd.xlane.f32.xlu0 %v1326
    %v1328 = vpop.xlane.xlu0 %1327
    %v1329 = vsel %vm268, %v1325, 0.0
    %1330 = vadd.xlane.f32.xlu0 %v1329
    %v1331 = vpop.xlane.xlu0 %1330
    %v1332 = vrcp.pop %v1328
    %v1333 = vrcp.pop %v1331
    %v1334 = vmul.f32 %v1323, %v1332
    %v1335 = vmul.f32 %v1325, %v1333
    %1336 = vrot.lane.b32.xlu0 %v1023, 56
    %v1337 = vpop.permute.xlu0 %1336
    %1338 = vrot.lane.b32.xlu0 %v1022, 56
    %v1339 = vpop.permute.xlu0 %1338
    %v1342 = vsel %vm264, %v1334, 0
    %v1345 = vsel %vm264, %v1335, 0
    %v1347 = vsel %vm299, %v1339, 0
    %1349 = vmatprep.subr.mxu0 0.0
    %1350 = vmatpush1.msra.mxu0 0.0
    %1351 = vmatprep.subr.mxu0 0.0
    %1352 = vmatpush1.msra.mxu0 0.0
    %1353 = vmatprep.subr.mxu0 0.0
    %1354 = vmatpush1.msra.mxu0 0.0
    %1355 = vmatprep.subr.mxu0 0.0
    %1356 = vmatpush1.msra.mxu0 0.0
    %1357 = vmatprep.subr.mxu0 0.0
    %1358 = vmatpush1.msra.mxu0 0.0
    %1359 = vmatprep.subr.mxu0 0.0
    %1360 = vmatpush1.msra.mxu0 0.0
    %1361 = vmatprep.subr.mxu0 0.0
    %1362 = vmatpush1.msra.mxu0 0.0
    %1363 = vmatprep.subr.mxu0 0.0
    %1364 = vmatpush1.msra.mxu0 0.0
    %1365 = vmatprep.subr.mxu0 0.0
    %1366 = vmatpush1.msra.mxu0 0.0
    %1367 = vmatprep.subr.mxu0 0.0
    %1368 = vmatpush1.msra.mxu0 0.0
    %1369 = vmatprep.subr.mxu0 0.0
    %1370 = vmatpush1.msra.mxu0 0.0
    %1371 = vmatprep.subr.mxu0 0.0
    %1372 = vmatpush1.msra.mxu0 0.0
    %1373 = vmatprep.subr.mxu0 0.0
    %1374 = vmatpush1.msra.mxu0 0.0
    %1375 = vmatprep.subr.mxu0 0.0
    %1376 = vmatpush1.msra.mxu0 0.0
    %1377 = vmatprep.subr.mxu0 0.0
    %1378 = vmatpush1.msra.mxu0 %v1347
    %1379 = vmatprep.subr.mxu0 0.0
    %1380 = vmatpush1.msra.mxu0 %v1337
    %1381 = vmatprep.subr.mxu0 0.0
    %1382 = vmatpush2.msra.mxu0 0.0
    %1383 = vmatprep.subr.mxu0 0.0
    %1384 = vmatpush2.msra.mxu0 0.0
    %1385 = vmatprep.subr.mxu0 0.0
    %1386 = vmatpush2.msra.mxu0 0.0
    %1387 = vmatprep.subr.mxu0 0.0
    %1388 = vmatpush2.msra.mxu0 0.0
    %1389 = vmatprep.subr.mxu0 0.0
    %1390 = vmatpush2.msra.mxu0 0.0
    %1391 = vmatprep.subr.mxu0 0.0
    %1392 = vmatpush2.msra.mxu0 0.0
    %1393 = vmatprep.subr.mxu0 0.0
    %1394 = vmatpush2.msra.mxu0 0.0
    %1395 = vmatprep.subr.mxu0 0.0
    %1396 = vmatpush2.msra.mxu0 0.0
    %1397 = vmatprep.subr.mxu0 0.0
    %1398 = vmatpush2.msra.mxu0 0.0
    %1399 = vmatprep.subr.mxu0 0.0
    %1400 = vmatpush2.msra.mxu0 0.0
    %1401 = vmatprep.subr.mxu0 0.0
    %1402 = vmatpush2.msra.mxu0 0.0
    %1403 = vmatprep.subr.mxu0 0.0
    %1404 = vmatpush2.msra.mxu0 0.0
    %1405 = vmatprep.subr.mxu0 0.0
    %1406 = vmatpush2.msra.mxu0 0.0
    %1407 = vmatprep.subr.mxu0 0.0
    %1408 = vmatpush2.msra.mxu0 0.0
    %1409 = vmatprep.subr.mxu0 0.0
    %1410 = vmatpush2.msra.mxu0 0.0
    %1411 = vmatprep.subr.mxu0 0.0
    %1412 = vmatpush2.msra.mxu0 0.0
    %1413 = vmatprep.mubr.f32.mxu0 0.0
    %1414 = vmatmul.mubr.f32.gmra.mxu0 %v1342
    %v1415 = vpop.f32.mrf.mxu0
    %v1416 = vadd.f32 0.0, %v1415
    %v1417 = vpop.f32.mrf.mxu0
    %1418 = vmatprep.mubr.f32.mxu0 0.0
    %1419 = vmatmul.mubr.f32.gmra.mxu0 %v1345
    %v1420 = vpop.f32.mrf.mxu0
    %v1421 = vadd.f32 0.0, %v1420
    %v1422 = vpop.f32.mrf.mxu0
    %1423 = vdwg.mxu0
    %1426 = vrot.lane.b32.xlu0 %v1416, 8
    %v1427 = vpop.permute.xlu0 %1426
    %1428 = vrot.lane.b32.xlu0 %v1421, 8
    %v1429 = vpop.permute.xlu0 %1428
    %1432 = vst.msk [vmem:[#allocation2 + $0xa] sm:$0xff] %vm589, %v1427
    %1433 = vst.msk [vmem:[#allocation2 + $0x12] sm:$0x3] %vm591, %v1429
    %1434 = vrot.lane.b32.xlu0 %v1023, 112
    %v1435 = vpop.permute.xlu0 %1434
    %1436 = vrot.lane.b32.xlu0 %v1022, 112
    %v1437 = vpop.permute.xlu0 %1436
    %1438 = vrot.lane.b32.xlu0 %v1023, 80
    %v1439 = vpop.permute.xlu0 %1438
    %1440 = vrot.lane.b32.xlu0 %v1022, 80
    %v1441 = vpop.permute.xlu0 %1440
    %v1442 = vsel %vm180, %v1435, 0
    %v1444 = vsel %vm180, %v1437, 0
    %v1446 = vsel %vm180, %v1439, 0
    %v1448 = vsel %vm180, %v1441, 0
    %1450 = vmatprep.subr.mxu0 0.0
    %1451 = vmatpush1.xpose.msra.mxu0 0.0
    %1452 = vmatprep.subr.mxu0 0.0
    %1453 = vmatpush1.xpose.msra.mxu0 0.0
    %1454 = vmatprep.subr.mxu0 0.0
    %1455 = vmatpush1.xpose.msra.mxu0 0.0
    %1456 = vmatprep.subr.mxu0 0.0
    %1457 = vmatpush1.xpose.msra.mxu0 0.0
    %1458 = vmatprep.subr.mxu0 0.0
    %1459 = vmatpush1.xpose.msra.mxu0 0.0
    %1460 = vmatprep.subr.mxu0 0.0
    %1461 = vmatpush1.xpose.msra.mxu0 0.0
    %1462 = vmatprep.subr.mxu0 0.0
    %1463 = vmatpush1.xpose.msra.mxu0 0.0
    %1464 = vmatprep.subr.mxu0 0.0
    %1465 = vmatpush1.xpose.msra.mxu0 0.0
    %1466 = vmatprep.subr.mxu0 0.0
    %1467 = vmatpush1.xpose.msra.mxu0 0.0
    %1468 = vmatprep.subr.mxu0 0.0
    %1469 = vmatpush1.xpose.msra.mxu0 0.0
    %1470 = vmatprep.subr.mxu0 0.0
    %1471 = vmatpush1.xpose.msra.mxu0 0.0
    %1472 = vmatprep.subr.mxu0 0.0
    %1473 = vmatpush1.xpose.msra.mxu0 0.0
    %1474 = vmatprep.subr.mxu0 0.0
    %1475 = vmatpush1.xpose.msra.mxu0 0.0
    %1476 = vmatprep.subr.mxu0 0.0
    %1477 = vmatpush1.xpose.msra.mxu0 0.0
    %1478 = vmatprep.subr.mxu0 0.0
    %1479 = vmatpush1.xpose.msra.mxu0 %v1448
    %1480 = vmatprep.subr.mxu0 0.0
    %1481 = vmatpush1.xpose.msra.mxu0 %v1446
    %1482 = vmatprep.subr.mxu0 0.0
    %1483 = vmatpush2.xpose.msra.mxu0 0.0
    %1484 = vmatprep.subr.mxu0 0.0
    %1485 = vmatpush2.xpose.msra.mxu0 0.0
    %1486 = vmatprep.subr.mxu0 0.0
    %1487 = vmatpush2.xpose.msra.mxu0 0.0
    %1488 = vmatprep.subr.mxu0 0.0
    %1489 = vmatpush2.xpose.msra.mxu0 0.0
    %1490 = vmatprep.subr.mxu0 0.0
    %1491 = vmatpush2.xpose.msra.mxu0 0.0
    %1492 = vmatprep.subr.mxu0 0.0
    %1493 = vmatpush2.xpose.msra.mxu0 0.0
    %1494 = vmatprep.subr.mxu0 0.0
    %1495 = vmatpush2.xpose.msra.mxu0 0.0
    %1496 = vmatprep.subr.mxu0 0.0
    %1497 = vmatpush2.xpose.msra.mxu0 0.0
    %1498 = vmatprep.subr.mxu0 0.0
    %1499 = vmatpush2.xpose.msra.mxu0 0.0
    %1500 = vmatprep.subr.mxu0 0.0
    %1501 = vmatpush2.xpose.msra.mxu0 0.0
    %1502 = vmatprep.subr.mxu0 0.0
    %1503 = vmatpush2.xpose.msra.mxu0 0.0
    %1504 = vmatprep.subr.mxu0 0.0
    %1505 = vmatpush2.xpose.msra.mxu0 0.0
    %1506 = vmatprep.subr.mxu0 0.0
    %1507 = vmatpush2.xpose.msra.mxu0 0.0
    %1508 = vmatprep.subr.mxu0 0.0
    %1509 = vmatpush2.xpose.msra.mxu0 0.0
    %1510 = vmatprep.subr.mxu0 0.0
    %1511 = vmatpush2.xpose.msra.mxu0 0.0
    %1512 = vmatprep.subr.mxu0 0.0
    %1513 = vmatpush2.xpose.msra.mxu0 0.0
    %1514 = vmatprep.mubr.f32.mxu0 0.0
    %1515 = vmatmul.mubr.f32.gmra.mxu0 %v1442
    %v1516 = vpop.f32.mrf.mxu0
    %v1517 = vadd.f32 0.0, %v1516
    %v1518 = vpop.f32.mrf.mxu0
    %1519 = vmatprep.mubr.f32.mxu0 0.0
    %1520 = vmatmul.mubr.f32.gmra.mxu0 %v1444
    %v1521 = vpop.f32.mrf.mxu0
    %v1522 = vadd.f32 0.0, %v1521
    %v1523 = vpop.f32.mrf.mxu0
    %1524 = vdwg.mxu0
    %v1525 = vsel %vm264, %v1517, -inf
    %1526 = vmax.xlane.f32.xlu0 %v1525
    %v1527 = vpop.xlane.xlu0 %1526
    %v1528 = vsel %vm268, %v1522, -inf
    %1529 = vmax.xlane.f32.xlu0 %v1528
    %v1530 = vpop.xlane.xlu0 %1529
    %v1531 = vsub.f32 %v1517, %v1527
    %v1532 = vsub.f32 %v1522, %v1530
    %v1533 = vmul.f32 %v1531, 1.442695
    %v1534 = vpow.pop %v1533
    %v1535 = vmul.f32 %v1532, 1.442695
    %v1536 = vpow.pop %v1535
    %v1537 = vsel %vm264, %v1534, 0.0
    %1538 = vadd.xlane.f32.xlu0 %v1537
    %v1539 = vpop.xlane.xlu0 %1538
    %v1540 = vsel %vm268, %v1536, 0.0
    %1541 = vadd.xlane.f32.xlu0 %v1540
    %v1542 = vpop.xlane.xlu0 %1541
    %v1543 = vrcp.pop %v1539
    %v1544 = vrcp.pop %v1542
    %v1545 = vmul.f32 %v1534, %v1543
    %v1546 = vmul.f32 %v1536, %v1544
    %1547 = vrot.lane.b32.xlu0 %v1023, 48
    %v1548 = vpop.permute.xlu0 %1547
    %1549 = vrot.lane.b32.xlu0 %v1022, 48
    %v1550 = vpop.permute.xlu0 %1549
    %v1553 = vsel %vm264, %v1545, 0
    %v1556 = vsel %vm264, %v1546, 0
    %v1558 = vsel %vm299, %v1550, 0
    %1560 = vmatprep.subr.mxu0 0.0
    %1561 = vmatpush1.msra.mxu0 0.0
    %1562 = vmatprep.subr.mxu0 0.0
    %1563 = vmatpush1.msra.mxu0 0.0
    %1564 = vmatprep.subr.mxu0 0.0
    %1565 = vmatpush1.msra.mxu0 0.0
    %1566 = vmatprep.subr.mxu0 0.0
    %1567 = vmatpush1.msra.mxu0 0.0
    %1568 = vmatprep.subr.mxu0 0.0
    %1569 = vmatpush1.msra.mxu0 0.0
    %1570 = vmatprep.subr.mxu0 0.0
    %1571 = vmatpush1.msra.mxu0 0.0
    %1572 = vmatprep.subr.mxu0 0.0
    %1573 = vmatpush1.msra.mxu0 0.0
    %1574 = vmatprep.subr.mxu0 0.0
    %1575 = vmatpush1.msra.mxu0 0.0
    %1576 = vmatprep.subr.mxu0 0.0
    %1577 = vmatpush1.msra.mxu0 0.0
    %1578 = vmatprep.subr.mxu0 0.0
    %1579 = vmatpush1.msra.mxu0 0.0
    %1580 = vmatprep.subr.mxu0 0.0
    %1581 = vmatpush1.msra.mxu0 0.0
    %1582 = vmatprep.subr.mxu0 0.0
    %1583 = vmatpush1.msra.mxu0 0.0
    %1584 = vmatprep.subr.mxu0 0.0
    %1585 = vmatpush1.msra.mxu0 0.0
    %1586 = vmatprep.subr.mxu0 0.0
    %1587 = vmatpush1.msra.mxu0 0.0
    %1588 = vmatprep.subr.mxu0 0.0
    %1589 = vmatpush1.msra.mxu0 %v1558
    %1590 = vmatprep.subr.mxu0 0.0
    %1591 = vmatpush1.msra.mxu0 %v1548
    %1592 = vmatprep.subr.mxu0 0.0
    %1593 = vmatpush2.msra.mxu0 0.0
    %1594 = vmatprep.subr.mxu0 0.0
    %1595 = vmatpush2.msra.mxu0 0.0
    %1596 = vmatprep.subr.mxu0 0.0
    %1597 = vmatpush2.msra.mxu0 0.0
    %1598 = vmatprep.subr.mxu0 0.0
    %1599 = vmatpush2.msra.mxu0 0.0
    %1600 = vmatprep.subr.mxu0 0.0
    %1601 = vmatpush2.msra.mxu0 0.0
    %1602 = vmatprep.subr.mxu0 0.0
    %1603 = vmatpush2.msra.mxu0 0.0
    %1604 = vmatprep.subr.mxu0 0.0
    %1605 = vmatpush2.msra.mxu0 0.0
    %1606 = vmatprep.subr.mxu0 0.0
    %1607 = vmatpush2.msra.mxu0 0.0
    %1608 = vmatprep.subr.mxu0 0.0
    %1609 = vmatpush2.msra.mxu0 0.0
    %1610 = vmatprep.subr.mxu0 0.0
    %1611 = vmatpush2.msra.mxu0 0.0
    %1612 = vmatprep.subr.mxu0 0.0
    %1613 = vmatpush2.msra.mxu0 0.0
    %1614 = vmatprep.subr.mxu0 0.0
    %1615 = vmatpush2.msra.mxu0 0.0
    %1616 = vmatprep.subr.mxu0 0.0
    %1617 = vmatpush2.msra.mxu0 0.0
    %1618 = vmatprep.subr.mxu0 0.0
    %1619 = vmatpush2.msra.mxu0 0.0
    %1620 = vmatprep.subr.mxu0 0.0
    %1621 = vmatpush2.msra.mxu0 0.0
    %1622 = vmatprep.subr.mxu0 0.0
    %1623 = vmatpush2.msra.mxu0 0.0
    %1624 = vmatprep.mubr.f32.mxu0 0.0
    %1625 = vmatmul.mubr.f32.gmra.mxu0 %v1553
    %v1626 = vpop.f32.mrf.mxu0
    %v1627 = vadd.f32 0.0, %v1626
    %v1628 = vpop.f32.mrf.mxu0
    %1629 = vmatprep.mubr.f32.mxu0 0.0
    %1630 = vmatmul.mubr.f32.gmra.mxu0 %v1556
    %v1631 = vpop.f32.mrf.mxu0
    %v1632 = vadd.f32 0.0, %v1631
    %v1633 = vpop.f32.mrf.mxu0
    %1634 = vdwg.mxu0
    %1637 = vrot.lane.b32.xlu0 %v1627, 16
    %v1638 = vpop.permute.xlu0 %1637
    %1639 = vrot.lane.b32.xlu0 %v1632, 16
    %v1640 = vpop.permute.xlu0 %1639
    %1643 = vst.msk [vmem:[#allocation2 + $0xa] sm:$0xff] %vm802, %v1638
    %1644 = vst.msk [vmem:[#allocation2 + $0x12] sm:$0x3] %vm804, %v1640
    %1645 = vrot.lane.b32.xlu0 %v1023, 104
    %v1646 = vpop.permute.xlu0 %1645
    %1647 = vrot.lane.b32.xlu0 %v1022, 104
    %v1648 = vpop.permute.xlu0 %1647
    %1649 = vrot.lane.b32.xlu0 %v1023, 72
    %v1650 = vpop.permute.xlu0 %1649
    %1651 = vrot.lane.b32.xlu0 %v1022, 72
    %v1652 = vpop.permute.xlu0 %1651
    %v1653 = vsel %vm180, %v1646, 0
    %v1655 = vsel %vm180, %v1648, 0
    %v1657 = vsel %vm180, %v1650, 0
    %v1659 = vsel %vm180, %v1652, 0
    %1661 = vmatprep.subr.mxu0 0.0
    %1662 = vmatpush1.xpose.msra.mxu0 0.0
    %1663 = vmatprep.subr.mxu0 0.0
    %1664 = vmatpush1.xpose.msra.mxu0 0.0
    %1665 = vmatprep.subr.mxu0 0.0
    %1666 = vmatpush1.xpose.msra.mxu0 0.0
    %1667 = vmatprep.subr.mxu0 0.0
    %1668 = vmatpush1.xpose.msra.mxu0 0.0
    %1669 = vmatprep.subr.mxu0 0.0
    %1670 = vmatpush1.xpose.msra.mxu0 0.0
    %1671 = vmatprep.subr.mxu0 0.0
    %1672 = vmatpush1.xpose.msra.mxu0 0.0
    %1673 = vmatprep.subr.mxu0 0.0
    %1674 = vmatpush1.xpose.msra.mxu0 0.0
    %1675 = vmatprep.subr.mxu0 0.0
    %1676 = vmatpush1.xpose.msra.mxu0 0.0
    %1677 = vmatprep.subr.mxu0 0.0
    %1678 = vmatpush1.xpose.msra.mxu0 0.0
    %1679 = vmatprep.subr.mxu0 0.0
    %1680 = vmatpush1.xpose.msra.mxu0 0.0
    %1681 = vmatprep.subr.mxu0 0.0
    %1682 = vmatpush1.xpose.msra.mxu0 0.0
    %1683 = vmatprep.subr.mxu0 0.0
    %1684 = vmatpush1.xpose.msra.mxu0 0.0
    %1685 = vmatprep.subr.mxu0 0.0
    %1686 = vmatpush1.xpose.msra.mxu0 0.0
    %1687 = vmatprep.subr.mxu0 0.0
    %1688 = vmatpush1.xpose.msra.mxu0 0.0
    %1689 = vmatprep.subr.mxu0 0.0
    %1690 = vmatpush1.xpose.msra.mxu0 %v1659
    %1691 = vmatprep.subr.mxu0 0.0
    %1692 = vmatpush1.xpose.msra.mxu0 %v1657
    %1693 = vmatprep.subr.mxu0 0.0
    %1694 = vmatpush2.xpose.msra.mxu0 0.0
    %1695 = vmatprep.subr.mxu0 0.0
    %1696 = vmatpush2.xpose.msra.mxu0 0.0
    %1697 = vmatprep.subr.mxu0 0.0
    %1698 = vmatpush2.xpose.msra.mxu0 0.0
    %1699 = vmatprep.subr.mxu0 0.0
    %1700 = vmatpush2.xpose.msra.mxu0 0.0
    %1701 = vmatprep.subr.mxu0 0.0
    %1702 = vmatpush2.xpose.msra.mxu0 0.0
    %1703 = vmatprep.subr.mxu0 0.0
    %1704 = vmatpush2.xpose.msra.mxu0 0.0
    %1705 = vmatprep.subr.mxu0 0.0
    %1706 = vmatpush2.xpose.msra.mxu0 0.0
    %1707 = vmatprep.subr.mxu0 0.0
    %1708 = vmatpush2.xpose.msra.mxu0 0.0
    %1709 = vmatprep.subr.mxu0 0.0
    %1710 = vmatpush2.xpose.msra.mxu0 0.0
    %1711 = vmatprep.subr.mxu0 0.0
    %1712 = vmatpush2.xpose.msra.mxu0 0.0
    %1713 = vmatprep.subr.mxu0 0.0
    %1714 = vmatpush2.xpose.msra.mxu0 0.0
    %1715 = vmatprep.subr.mxu0 0.0
    %1716 = vmatpush2.xpose.msra.mxu0 0.0
    %1717 = vmatprep.subr.mxu0 0.0
    %1718 = vmatpush2.xpose.msra.mxu0 0.0
    %1719 = vmatprep.subr.mxu0 0.0
    %1720 = vmatpush2.xpose.msra.mxu0 0.0
    %1721 = vmatprep.subr.mxu0 0.0
    %1722 = vmatpush2.xpose.msra.mxu0 0.0
    %1723 = vmatprep.subr.mxu0 0.0
    %1724 = vmatpush2.xpose.msra.mxu0 0.0
    %1725 = vmatprep.mubr.f32.mxu0 0.0
    %1726 = vmatmul.mubr.f32.gmra.mxu0 %v1653
    %v1727 = vpop.f32.mrf.mxu0
    %v1728 = vadd.f32 0.0, %v1727
    %v1729 = vpop.f32.mrf.mxu0
    %1730 = vmatprep.mubr.f32.mxu0 0.0
    %1731 = vmatmul.mubr.f32.gmra.mxu0 %v1655
    %v1732 = vpop.f32.mrf.mxu0
    %v1733 = vadd.f32 0.0, %v1732
    %v1734 = vpop.f32.mrf.mxu0
    %1735 = vdwg.mxu0
    %v1736 = vsel %vm264, %v1728, -inf
    %1737 = vmax.xlane.f32.xlu0 %v1736
    %v1738 = vpop.xlane.xlu0 %1737
    %v1739 = vsel %vm268, %v1733, -inf
    %1740 = vmax.xlane.f32.xlu0 %v1739
    %v1741 = vpop.xlane.xlu0 %1740
    %v1742 = vsub.f32 %v1728, %v1738
    %v1743 = vsub.f32 %v1733, %v1741
    %v1744 = vmul.f32 %v1742, 1.442695
    %v1745 = vpow.pop %v1744
    %v1746 = vmul.f32 %v1743, 1.442695
    %v1747 = vpow.pop %v1746
    %v1748 = vsel %vm264, %v1745, 0.0
    %1749 = vadd.xlane.f32.xlu0 %v1748
    %v1750 = vpop.xlane.xlu0 %1749
    %v1751 = vsel %vm268, %v1747, 0.0
    %1752 = vadd.xlane.f32.xlu0 %v1751
    %v1753 = vpop.xlane.xlu0 %1752
    %v1754 = vrcp.pop %v1750
    %v1755 = vrcp.pop %v1753
    %v1756 = vmul.f32 %v1745, %v1754
    %v1757 = vmul.f32 %v1747, %v1755
    %1758 = vrot.lane.b32.xlu0 %v1023, 40
    %v1759 = vpop.permute.xlu0 %1758
    %1760 = vrot.lane.b32.xlu0 %v1022, 40
    %v1761 = vpop.permute.xlu0 %1760
    %v1764 = vsel %vm264, %v1756, 0
    %v1767 = vsel %vm264, %v1757, 0
    %v1769 = vsel %vm299, %v1761, 0
    %1771 = vmatprep.subr.mxu0 0.0
    %1772 = vmatpush1.msra.mxu0 0.0
    %1773 = vmatprep.subr.mxu0 0.0
    %1774 = vmatpush1.msra.mxu0 0.0
    %1775 = vmatprep.subr.mxu0 0.0
    %1776 = vmatpush1.msra.mxu0 0.0
    %1777 = vmatprep.subr.mxu0 0.0
    %1778 = vmatpush1.msra.mxu0 0.0
    %1779 = vmatprep.subr.mxu0 0.0
    %1780 = vmatpush1.msra.mxu0 0.0
    %1781 = vmatprep.subr.mxu0 0.0
    %1782 = vmatpush1.msra.mxu0 0.0
    %1783 = vmatprep.subr.mxu0 0.0
    %1784 = vmatpush1.msra.mxu0 0.0
    %1785 = vmatprep.subr.mxu0 0.0
    %1786 = vmatpush1.msra.mxu0 0.0
    %1787 = vmatprep.subr.mxu0 0.0
    %1788 = vmatpush1.msra.mxu0 0.0
    %1789 = vmatprep.subr.mxu0 0.0
    %1790 = vmatpush1.msra.mxu0 0.0
    %1791 = vmatprep.subr.mxu0 0.0
    %1792 = vmatpush1.msra.mxu0 0.0
    %1793 = vmatprep.subr.mxu0 0.0
    %1794 = vmatpush1.msra.mxu0 0.0
    %1795 = vmatprep.subr.mxu0 0.0
    %1796 = vmatpush1.msra.mxu0 0.0
    %1797 = vmatprep.subr.mxu0 0.0
    %1798 = vmatpush1.msra.mxu0 0.0
    %1799 = vmatprep.subr.mxu0 0.0
    %1800 = vmatpush1.msra.mxu0 %v1769
    %1801 = vmatprep.subr.mxu0 0.0
    %1802 = vmatpush1.msra.mxu0 %v1759
    %1803 = vmatprep.subr.mxu0 0.0
    %1804 = vmatpush2.msra.mxu0 0.0
    %1805 = vmatprep.subr.mxu0 0.0
    %1806 = vmatpush2.msra.mxu0 0.0
    %1807 = vmatprep.subr.mxu0 0.0
    %1808 = vmatpush2.msra.mxu0 0.0
    %1809 = vmatprep.subr.mxu0 0.0
    %1810 = vmatpush2.msra.mxu0 0.0
    %1811 = vmatprep.subr.mxu0 0.0
    %1812 = vmatpush2.msra.mxu0 0.0
    %1813 = vmatprep.subr.mxu0 0.0
    %1814 = vmatpush2.msra.mxu0 0.0
    %1815 = vmatprep.subr.mxu0 0.0
    %1816 = vmatpush2.msra.mxu0 0.0
    %1817 = vmatprep.subr.mxu0 0.0
    %1818 = vmatpush2.msra.mxu0 0.0
    %1819 = vmatprep.subr.mxu0 0.0
    %1820 = vmatpush2.msra.mxu0 0.0
    %1821 = vmatprep.subr.mxu0 0.0
    %1822 = vmatpush2.msra.mxu0 0.0
    %1823 = vmatprep.subr.mxu0 0.0
    %1824 = vmatpush2.msra.mxu0 0.0
    %1825 = vmatprep.subr.mxu0 0.0
    %1826 = vmatpush2.msra.mxu0 0.0
    %1827 = vmatprep.subr.mxu0 0.0
    %1828 = vmatpush2.msra.mxu0 0.0
    %1829 = vmatprep.subr.mxu0 0.0
    %1830 = vmatpush2.msra.mxu0 0.0
    %1831 = vmatprep.subr.mxu0 0.0
    %1832 = vmatpush2.msra.mxu0 0.0
    %1833 = vmatprep.subr.mxu0 0.0
    %1834 = vmatpush2.msra.mxu0 0.0
    %1835 = vmatprep.mubr.f32.mxu0 0.0
    %1836 = vmatmul.mubr.f32.gmra.mxu0 %v1764
    %v1837 = vpop.f32.mrf.mxu0
    %v1838 = vadd.f32 0.0, %v1837
    %v1839 = vpop.f32.mrf.mxu0
    %1840 = vmatprep.mubr.f32.mxu0 0.0
    %1841 = vmatmul.mubr.f32.gmra.mxu0 %v1767
    %v1842 = vpop.f32.mrf.mxu0
    %v1843 = vadd.f32 0.0, %v1842
    %v1844 = vpop.f32.mrf.mxu0
    %1845 = vdwg.mxu0
    %1848 = vrot.lane.b32.xlu0 %v1838, 24
    %v1849 = vpop.permute.xlu0 %1848
    %1850 = vrot.lane.b32.xlu0 %v1843, 24
    %v1851 = vpop.permute.xlu0 %1850
    %1854 = vst.msk [vmem:[#allocation2 + $0xa] sm:$0xff] %vm1015, %v1849
    %1855 = vst.msk [vmem:[#allocation2 + $0x12] sm:$0x3] %vm1017, %v1851
    %v1856 = vld [vmem:[#allocation2] sm:$0xff]
    %v1857 = vld [vmem:[#allocation2 + $0x8] sm:$0xff]
    %v1858 = vld [vmem:[#allocation2 + $0x10] sm:$0xf]
    %v1859 = vld [vmem:[#allocation8] sm:$0xff]
    %v1860 = vld [vmem:[#allocation8 + $0x8] sm:$0xff]
    %v1861 = vld [vmem:[#allocation8 + $0x10] sm:$0xff]
    %v1862 = vld [vmem:[#allocation8 + $0x18] sm:$0xff]
    %v1863 = vld [vmem:[%s4] sm:$0x1]
    %v1865 = vlaneseq
    %v1866 = vshrl.u32 %v1865, 7
    %v1867 = vsub.s32 0, %v1866
    %v1868 = vrot.slane %v1863, %v1867
    %vm1870 = vcmask 261120
    %v1872 = vsel %vm1870, %v1856, 0
    %v1875 = vsel %vm1870, %v1857, 0
    %v1878 = vsel %vm1870, %v1858, 0
    %1880 = vmatprep.subr.mxu0 0.0
    %1881 = vmatpush1.msra.mxu0 0.0
    %1882 = vmatprep.subr.mxu0 0.0
    %1883 = vmatpush1.msra.mxu0 0.0
    %1884 = vmatprep.subr.mxu0 0.0
    %1885 = vmatpush1.msra.mxu0 0.0
    %1886 = vmatprep.subr.mxu0 0.0
    %1887 = vmatpush1.msra.mxu0 0.0
    %1888 = vmatprep.subr.mxu0 0.0
    %1889 = vmatpush1.msra.mxu0 0.0
    %1890 = vmatprep.subr.mxu0 0.0
    %1891 = vmatpush1.msra.mxu0 0.0
    %1892 = vmatprep.subr.mxu0 0.0
    %1893 = vmatpush1.msra.mxu0 0.0
    %1894 = vmatprep.subr.mxu0 0.0
    %1895 = vmatpush1.msra.mxu0 0.0
    %1896 = vmatprep.subr.mxu0 0.0
    %1897 = vmatpush1.msra.mxu0 0.0
    %1898 = vmatprep.subr.mxu0 0.0
    %1899 = vmatpush1.msra.mxu0 0.0
    %1900 = vmatprep.subr.mxu0 0.0
    %1901 = vmatpush1.msra.mxu0 0.0
    %1902 = vmatprep.subr.mxu0 0.0
    %1903 = vmatpush1.msra.mxu0 0.0
    %1904 = vmatprep.subr.mxu0 0.0
    %1905 = vmatpush1.msra.mxu0 %v1862
    %1906 = vmatprep.subr.mxu0 0.0
    %1907 = vmatpush1.msra.mxu0 %v1861
    %1908 = vmatprep.subr.mxu0 0.0
    %1909 = vmatpush1.msra.mxu0 %v1860
    %1910 = vmatprep.subr.mxu0 0.0
    %1911 = vmatpush1.msra.mxu0 %v1859
    %1912 = vmatprep.subr.mxu0 0.0
    %1913 = vmatpush2.msra.mxu0 0.0
    %1914 = vmatprep.subr.mxu0 0.0
    %1915 = vmatpush2.msra.mxu0 0.0
    %1916 = vmatprep.subr.mxu0 0.0
    %1917 = vmatpush2.msra.mxu0 0.0
    %1918 = vmatprep.subr.mxu0 0.0
    %1919 = vmatpush2.msra.mxu0 0.0
    %1920 = vmatprep.subr.mxu0 0.0
    %1921 = vmatpush2.msra.mxu0 0.0
    %1922 = vmatprep.subr.mxu0 0.0
    %1923 = vmatpush2.msra.mxu0 0.0
    %1924 = vmatprep.subr.mxu0 0.0
    %1925 = vmatpush2.msra.mxu0 0.0
    %1926 = vmatprep.subr.mxu0 0.0
    %1927 = vmatpush2.msra.mxu0 0.0
    %1928 = vmatprep.subr.mxu0 0.0
    %1929 = vmatpush2.msra.mxu0 0.0
    %1930 = vmatprep.subr.mxu0 0.0
    %1931 = vmatpush2.msra.mxu0 0.0
    %1932 = vmatprep.subr.mxu0 0.0
    %1933 = vmatpush2.msra.mxu0 0.0
    %1934 = vmatprep.subr.mxu0 0.0
    %1935 = vmatpush2.msra.mxu0 0.0
    %1936 = vmatprep.subr.mxu0 0.0
    %1937 = vmatpush2.msra.mxu0 0.0
    %1938 = vmatprep.subr.mxu0 0.0
    %1939 = vmatpush2.msra.mxu0 0.0
    %1940 = vmatprep.subr.mxu0 0.0
    %1941 = vmatpush2.msra.mxu0 0.0
    %1942 = vmatprep.subr.mxu0 0.0
    %1943 = vmatpush2.msra.mxu0 0.0
    %1944 = vmatprep.mubr.f32.mxu0 0.0
    %1945 = vmatmul.mubr.f32.gmra.mxu0 %v1872
    %v1946 = vpop.f32.mrf.mxu0
    %v1947 = vadd.f32 %v1868, %v1946
    %v1948 = vpop.f32.mrf.mxu0
    %1949 = vmatprep.mubr.f32.mxu0 0.0
    %1950 = vmatmul.mubr.f32.gmra.mxu0 %v1875
    %v1951 = vpop.f32.mrf.mxu0
    %v1952 = vadd.f32 %v1868, %v1951
    %v1953 = vpop.f32.mrf.mxu0
    %1954 = vmatprep.mubr.f32.mxu0 0.0
    %1955 = vmatmul.mubr.f32.gmra.mxu0 %v1878
    %v1956 = vpop.f32.mrf.mxu0
    %v1957 = vadd.f32 %v1868, %v1956
    %v1958 = vpop.f32.mrf.mxu0
    %1959 = vdwg.mxu0
    %1960 = vst.msk [vmem:[#allocation9] sm:$0xff] %vm1870, %v1947
    %1961 = vst.msk [vmem:[#allocation9 + $0x8] sm:$0xff] %vm1870, %v1952
    %vm1962 = vcmask 257024
    %1963 = vst.msk [vmem:[#allocation9 + $0x10] sm:$0xf] %vm1962, %v1957
    // Predicated region
    $region34: #{tpu_custom_call.1} parent=1 // pred_check
      _
    $region35: #{tpu_custom_call.1} parent=1 // pred_check_branch
      %1965 = sbr.rel (0) target = $region37
    $region36: #{tpu_custom_call.1} parent=1 // pred_region
      %s1967 = ssub.s32 384, 384
      %1968 = vsyncadd [#allocation5], %s1967
      %s1969 = sshll.u32 [#allocation9], 4
      %s1970 = int_to_ptr.vmem [resolvable:$true] %s1969
      %1975 = dma.vmem_to_hbm [thread:$0]  %s1970, 384, %s5, [#allocation5], 128, 128, 8
    $region37: #{tpu_custom_call.1} parent=1 // pred_fallthru
      _
    // Predicated region
    $region38: #{tpu_custom_call.1} parent=1 // pred_check
      _
    $region39: #{tpu_custom_call.1} parent=1 // pred_check_branch
      %1977 = sbr.rel (0) target = $region41
    $region40: #{tpu_custom_call.1} parent=1 // pred_region
      %1978 = dma.done [#allocation5], 384
    $region41: #{tpu_custom_call.1} parent=1 // pred_fallthru
      _
    %1979 = vsyncpa [#allocation4], 1
    %1980 = vsyncpa [#allocation7], 1
    %1981 = vsyncpa [#allocation5], 1

</llo_original>
